<compile_context>
chip_gen: v6e
topology: v6e:2x2x1
jax: 0.10.0
libtpu: 0.0.40
codegen_flags: <defaults>
</compile_context>

<pallas_src>
import functools

import jax
import jax.numpy as jnp
from jax.experimental import pallas as pl
from jax.experimental.pallas import tpu as pltpu


def _layernorm(x, w, b, eps):
    mu = jnp.mean(x, axis=-1, keepdims=True)
    xc = x - mu
    var = jnp.mean(xc * xc, axis=-1, keepdims=True)
    return xc * jax.lax.rsqrt(var + eps) * w + b


def _flatten_batch_major(x):
    """(seq, B, E) value -> (B*seq, E) rows in batch-major order.

    Decomposed into per-batch sublane selects + a major-axis concat so the
    relayout happens once per tile in VMEM (robust Mosaic lowering) instead of
    as a full HBM transpose copy in the wrapper.
    """
    B = x.shape[1]
    if B == 1:
        return x[:, 0, :]
    return jnp.concatenate([x[:, b, :] for b in range(B)], axis=0)


def _encoder_layer_kernel(nhead, has_pos, separate_kv, approx_recip, *refs):
    refs = list(refs)
    i = 0
    src_q_ref = refs[i]; i += 1
    pos_q_ref = None
    if has_pos:
        pos_q_ref = refs[i]; i += 1
    if separate_kv:
        src_kv_ref = refs[i]; i += 1
        pos_kv_ref = None
        if has_pos:
            pos_kv_ref = refs[i]; i += 1
    else:
        src_kv_ref, pos_kv_ref = src_q_ref, pos_q_ref
    (wq_ref, bq_ref, wk_ref, bk_ref, wv_ref, bv_ref,
     wo_ref, bo_ref, ln1w_ref, ln1b_ref, ln2w_ref, ln2b_ref) = refs[i:i + 12]
    out_ref = refs[i + 12]

    cd = wq_ref.dtype                         # MXU operand dtype (bf16 default)
    tq, B, E = src_q_ref.shape
    S = src_kv_ref.shape[0]
    Dh = E // nhead

    # pos-add fused into the kernel (VPU) -- no HBM round trip for q=k=src+pos.
    src_q = src_q_ref[...]
    qk_q = src_q if pos_q_ref is None else src_q + pos_q_ref[...]
    if separate_kv:
        src_kv = src_kv_ref[...]
        qk_kv = src_kv if pos_kv_ref is None else src_kv + pos_kv_ref[...]
    else:
        src_kv, qk_kv = src_q, qk_q

    resid = _flatten_batch_major(src_q)                  # (B*tq, E) f32
    q2 = _flatten_batch_major(qk_q).astype(cd)           # (B*tq, E)
    k2 = _flatten_batch_major(qk_kv).astype(cd)          # (B*S,  E)
    v2 = _flatten_batch_major(src_kv).astype(cd)         # (B*S,  E)

    acc = jnp.zeros((B * tq, E), jnp.float32)
    for h in range(nhead):                    # only the head loop is unrolled
        # Head-major weights: wq_ref[h] etc. is a free leading-dim index.
        qh = (jnp.dot(q2, wq_ref[h], preferred_element_type=jnp.float32)
              + bq_ref[h]).astype(cd).reshape(B, tq, Dh)
        kh = (jnp.dot(k2, wk_ref[h], preferred_element_type=jnp.float32)
              + bk_ref[h]).astype(cd).reshape(B, S, Dh)
        vh = (jnp.dot(v2, wv_ref[h], preferred_element_type=jnp.float32)
              + bv_ref[h]).astype(cd).reshape(B, S, Dh)
        # Leading-batch batched attention (no per-batch Python unroll).
        s = jnp.einsum('bqd,bkd->bqk', qh, kh,
                       preferred_element_type=jnp.float32)        # (B,tq,S) f32
        s = s - jnp.max(s, axis=-1, keepdims=True)
        p = jnp.exp(s)
        p = p * pl.reciprocal(jnp.sum(p, axis=-1, keepdims=True),
                              approx=approx_recip)
        pv = jnp.einsum('bqk,bkd->bqd', p.astype(cd), vh,
                        preferred_element_type=jnp.float32)       # (B,tq,Dh)
        # Per-head out-projection accumulated into a lane-dense (rows,E) acc --
        # no attn scratch buffer, no masked Dh-wide partial stores.
        acc = acc + jnp.dot(pv.astype(cd).reshape(B * tq, Dh), wo_ref[h],
                            preferred_element_type=jnp.float32)

    x = resid + acc + bo_ref[...]                        # dropout1 = identity
    x = _layernorm(x, ln1w_ref[...], ln1b_ref[...], eps=1e-5)
    # Reference: `src = src + dropout2(src)` (FFN output discarded), then norm2;
    # LayerNorm(2x, eps) == LayerNorm(x, eps/4) folds the doubling away exactly.
    y = _layernorm(x, ln2w_ref[...], ln2b_ref[...], eps=1e-5 / 4)

    for b in range(B):                        # lane-dense (full-E) row stores
        out_ref[:, b, :] = y[b * tq:(b + 1) * tq, :]


def _vmem_capacity_bytes():
    try:
        return int(pltpu.get_tpu_info().vmem_capacity_bytes)
    except Exception:
        return 64 << 20            # assume the smallest (v7x per-core) VMEM


def _kernel_vmem_bytes(tq, S, B, E, nhead, cd_bytes, has_pos, separate_kv):
    """Rough per-step VMEM footprint: pipeline buffers + live values."""
    Dh = E // nhead
    f32 = 4
    n_q = 1 + int(has_pos)
    n_kv = (1 + int(has_pos)) if separate_kv else 0
    blocks = 2 * n_q * tq * B * E * f32           # q-side inputs, double-buffered
    blocks += 2 * n_kv * S * B * E * f32          # full-seq K/V source inputs
    blocks += 2 * tq * B * E * f32                # output block
    weights = 2 * 4 * nhead * E * Dh * cd_bytes   # wq/wk/wv/wo, double-buffered
    vals = 4 * B * tq * E * f32                   # qk/resid/acc/x live values
    vals += 2 * B * S * E * (f32 + cd_bytes)      # kv-side values (f32 + cast)
    vals += 2 * B * tq * S * f32                  # scores + probabilities
    vals += 3 * B * (S + tq) * Dh * f32           # per-head q/k/v/pv temporaries
    return blocks + weights + vals


def _pick_tq(S, B, E, nhead, cd_bytes, has_pos, vmem_cap):
    """Largest query tile that fits a conservative share of this chip's VMEM.

    Prefers a single step (K/V projected exactly once); otherwise the largest
    8-aligned divisor of S that fits the budget.
    """
    budget = int(vmem_cap * 0.45)
    if S <= 8 or _kernel_vmem_bytes(S, S, B, E, nhead, cd_bytes,
                                    has_pos, False) <= budget:
        return S
    best = None
    for tq in range(8, S, 8):
        if S % tq == 0 and _kernel_vmem_bytes(tq, S, B, E, nhead, cd_bytes,
                                              has_pos, True) <= budget:
            best = tq
    if best is not None:
        return best
    for tq in range(8, S, 8):      # nothing fits the budget: smallest aligned tile
        if S % tq == 0:
            return tq
    return S


def transformer_encoder_layer(src, params, pos=None, *, nhead,
                              src_mask=None, src_key_padding_mask=None,
                              compute_dtype=jnp.bfloat16,
                              approx_softmax_recip=True,
                              tq=None, vmem_limit_bytes=None):
    """src, pos: (S, B, E) float32, PyTorch seq-first layout. Returns (S, B, E) f32."""
    if src_mask is not None or src_key_padding_mask is not None:
        raise NotImplementedError("attn_mask / key_padding_mask are not supported")
    S, B, E = src.shape
    assert E % nhead == 0, "d_model must be divisible by nhead"
    H = nhead
    Dh = E // H
    scale = float(Dh) ** -0.5
    cd_bytes = jnp.dtype(compute_dtype).itemsize

    src = jnp.asarray(src, jnp.float32)
    has_pos = pos is not None
    if has_pos:
        pos = jnp.asarray(pos, jnp.float32)

    in_w = jnp.asarray(params["in_w"], jnp.float32)      # (3E, E)
    in_b = jnp.asarray(params["in_b"], jnp.float32)      # (3E,)
    out_w = jnp.asarray(params["out_w"], jnp.float32)    # (E, E)
    out_b = jnp.asarray(params["out_b"], jnp.float32)    # (E,)

    def head_major(w, s=1.0):   # torch (H*Dh, E) weight -> pre-transposed (H, E, Dh)
        return (w * s).T.reshape(E, H, Dh).transpose(1, 0, 2).astype(compute_dtype)

    wq = head_major(in_w[:E], scale)            # 1/sqrt(Dh) folded into Q weights
    wk = head_major(in_w[E:2 * E])
    wv = head_major(in_w[2 * E:])
    bq = (in_b[:E] * scale).reshape(H, 1, Dh)   # biases stay f32 (added post-acc)
    bk = in_b[E:2 * E].reshape(H, 1, Dh)
    bv = in_b[2 * E:].reshape(H, 1, Dh)
    wo = out_w.T.reshape(H, Dh, E).astype(compute_dtype)  # head-major out-proj
    bo = out_b.reshape(1, E)

    def row(x):
        return jnp.asarray(x, jnp.float32).reshape(1, E)

    vmem_cap = _vmem_capacity_bytes()
    if tq is None:
        tq = _pick_tq(S, B, E, H, cd_bytes, has_pos, vmem_cap)
    assert S % tq == 0, "query tile must divide the sequence length"
    separate_kv = tq != S
    grid = (S // tq,)

    if vmem_limit_bytes is None:
        need = _kernel_vmem_bytes(tq, S, B, E, H, cd_bytes, has_pos, separate_kv)
        vmem_limit_bytes = min(int(vmem_cap * 0.9),
                               max(32 << 20, 2 * need + (8 << 20)))

    q_spec = pl.BlockSpec((tq, B, E), lambda i: (i, 0, 0))
    kv_spec = pl.BlockSpec((S, B, E), lambda i: (0, 0, 0))  # constant: fetched once

    def const_spec(a):
        nd = a.ndim
        return pl.BlockSpec(a.shape, lambda i, _nd=nd: (0,) * _nd)

    args, in_specs = [src], [q_spec]
    if has_pos:
        args.append(pos); in_specs.append(q_spec)
    if separate_kv:
        args.append(src); in_specs.append(kv_spec)
        if has_pos:
            args.append(pos); in_specs.append(kv_spec)
    weights = [wq, bq, wk, bk, wv, bv, wo, bo,
               row(params["ln1_w"]), row(params["ln1_b"]),
               row(params["ln2_w"]), row(params["ln2_b"])]
    args += weights
    in_specs += [const_spec(w) for w in weights]

    kernel = functools.partial(_encoder_layer_kernel, H, has_pos, separate_kv,
                               approx_softmax_recip)

    return pl.pallas_call(
        kernel,
        out_shape=jax.ShapeDtypeStruct((S, B, E), jnp.float32),
        grid_spec=pltpu.PrefetchScalarGridSpec(
            num_scalar_prefetch=0,
            grid=grid,
            in_specs=in_specs,
            out_specs=pl.BlockSpec((tq, B, E), lambda i: (i, 0, 0)),
        ),
        compiler_params=pltpu.CompilerParams(
            dimension_semantics=("parallel",),
            vmem_limit_bytes=vmem_limit_bytes),
    )(*args)


def ref_forward(src, params, pos=None, *, nhead):
    """Pure-JAX mirror of TransformerEncoderLayer.forward_post (eval mode)."""
    S, B, E = src.shape
    Dh = E // nhead
    qk = src if pos is None else src + pos
    in_w, in_b = params["in_w"], params["in_b"]
    q = qk @ in_w[:E].T + in_b[:E]
    k = qk @ in_w[E:2 * E].T + in_b[E:2 * E]
    v = src @ in_w[2 * E:].T + in_b[2 * E:]

    def split(x):  # (S,B,E) -> (B,H,S,Dh)
        return x.reshape(S, B, nhead, Dh).transpose(1, 2, 0, 3)

    qh, kh, vh = split(q) * (Dh ** -0.5), split(k), split(v)
    p = jax.nn.softmax(jnp.einsum('bhqd,bhkd->bhqk', qh, kh), axis=-1)
    a = jnp.einsum('bhqk,bhkd->bhqd', p, vh).transpose(2, 0, 1, 3).reshape(S, B, E)
    attn_out = a @ params["out_w"].T + params["out_b"]
    x = _layernorm(src + attn_out, params["ln1_w"], params["ln1_b"], eps=1e-5)
    # The module computes the FFN here but discards it: `src = src + dropout2(src)`.
    y = x + x
    return _layernorm(y, params["ln2_w"], params["ln2_b"], eps=1e-5)


if __name__ == "__main__":
    S, B, E, H, F = 8, 2, 32, 4, 64
    keys = jax.random.split(jax.random.PRNGKey(0), 14)

    params = {
        "in_w":  0.1 * jax.random.normal(keys[0], (3 * E, E), jnp.float32),
        "in_b":  0.1 * jax.random.normal(keys[1], (3 * E,), jnp.float32),
        "out_w": 0.1 * jax.random.normal(keys[2], (E, E), jnp.float32),
        "out_b": 0.1 * jax.random.normal(keys[3], (E,), jnp.float32),
        "ln1_w": 1.0 + 0.1 * jax.random.normal(keys[4], (E,), jnp.float32),
        "ln1_b": 0.1 * jax.random.normal(keys[5], (E,), jnp.float32),
        # linear1/linear2 exist in the module but their output is discarded by
        # the reference (`src = src + dropout2(src)`) -> unused by the kernel.
        "lin1_w": 0.1 * jax.random.normal(keys[6], (F, E), jnp.float32),
        "lin1_b": 0.1 * jax.random.normal(keys[7], (F,), jnp.float32),
        "lin2_w": 0.1 * jax.random.normal(keys[8], (E, F), jnp.float32),
        "lin2_b": 0.1 * jax.random.normal(keys[9], (E,), jnp.float32),
        "ln2_w": 1.0 + 0.1 * jax.random.normal(keys[10], (E,), jnp.float32),
        "ln2_b": 0.1 * jax.random.normal(keys[11], (E,), jnp.float32),
    }

    src = jax.random.normal(keys[12], (S, B, E), jnp.float32)
    pos = jax.random.normal(keys[13], (S, B, E), jnp.float32)

    ref = ref_forward(src, params, pos=pos, nhead=H)

    # 1) Production path: bf16 MXU operands + EUP (approx) softmax reciprocal.
    out_bf16 = jax.block_until_ready(
        transformer_encoder_layer(src, params, pos=pos, nhead=H))
    assert out_bf16.shape == (S, B, E)
    assert jnp.allclose(out_bf16, ref, atol=5e-2, rtol=5e-2), (
        f"bf16 max_err={float(jnp.max(jnp.abs(out_bf16 - ref)))}")

    # 2) Exact path (f32 MXU operands, exact reciprocal): tight numeric check.
    out_f32 = jax.block_until_ready(
        transformer_encoder_layer(src, params, pos=pos, nhead=H,
                                  compute_dtype=jnp.float32,
                                  approx_softmax_recip=False))
    assert jnp.allclose(out_f32, ref, atol=1e-4, rtol=1e-4), (
        f"f32 max_err={float(jnp.max(jnp.abs(out_f32 - ref)))}")

    # 3) Tiled-query path (grid of 2 steps, separate full-seq K/V fetch) and
    #    the pos=None branch.
    S2 = 16
    src2 = jax.random.normal(jax.random.PRNGKey(1), (S2, B, E), jnp.float32)
    ref2 = ref_forward(src2, params, pos=None, nhead=H)
    out2 = jax.block_until_ready(
        transformer_encoder_layer(src2, params, pos=None, nhead=H,
                                  compute_dtype=jnp.float32,
                                  approx_softmax_recip=False, tq=8))
    assert jnp.allclose(out2, ref2, atol=1e-4, rtol=1e-4), (
        f"tiled max_err={float(jnp.max(jnp.abs(out2 - ref2)))}")

    print("KERNEL_OK")
</pallas_src>

<mosaic_0001>
module attributes {stable_mosaic.version = 11 : i64} {
  func.func @_encoder_layer_kernel(%arg0: i32, %arg1: memref<8x2x32xf32, #tpu.memory_space<vmem>>, %arg2: memref<8x2x32xf32, #tpu.memory_space<vmem>>, %arg3: memref<4x32x8xbf16, #tpu.memory_space<vmem>>, %arg4: memref<4x1x8xf32, #tpu.memory_space<vmem>>, %arg5: memref<4x32x8xbf16, #tpu.memory_space<vmem>>, %arg6: memref<4x1x8xf32, #tpu.memory_space<vmem>>, %arg7: memref<4x32x8xbf16, #tpu.memory_space<vmem>>, %arg8: memref<4x1x8xf32, #tpu.memory_space<vmem>>, %arg9: memref<4x8x32xbf16, #tpu.memory_space<vmem>>, %arg10: memref<1x32xf32, #tpu.memory_space<vmem>>, %arg11: memref<1x32xf32, #tpu.memory_space<vmem>>, %arg12: memref<1x32xf32, #tpu.memory_space<vmem>>, %arg13: memref<1x32xf32, #tpu.memory_space<vmem>>, %arg14: memref<1x32xf32, #tpu.memory_space<vmem>>, %arg15: memref<8x2x32xf32, #tpu.memory_space<vmem>>) attributes {dimension_semantics = [#tpu.dimension_semantics<parallel>], iteration_bounds = array<i64: 1>, scalar_prefetch = 0 : i64, scratch_operands = 0 : i64, tpu.core_type = #tpu.core_type<tc>, window_params = [{transform_indices = @transform_0, window_bounds = array<i64: 8, 2, 32>}, {transform_indices = @transform_1, window_bounds = array<i64: 8, 2, 32>}, {pipeline_mode = #tpu.pipeline_mode<synchronous>, transform_indices = @transform_2, window_bounds = array<i64: 4, 32, 8>}, {pipeline_mode = #tpu.pipeline_mode<synchronous>, transform_indices = @transform_3, window_bounds = array<i64: 4, 1, 8>}, {pipeline_mode = #tpu.pipeline_mode<synchronous>, transform_indices = @transform_4, window_bounds = array<i64: 4, 32, 8>}, {pipeline_mode = #tpu.pipeline_mode<synchronous>, transform_indices = @transform_5, window_bounds = array<i64: 4, 1, 8>}, {pipeline_mode = #tpu.pipeline_mode<synchronous>, transform_indices = @transform_6, window_bounds = array<i64: 4, 32, 8>}, {pipeline_mode = #tpu.pipeline_mode<synchronous>, transform_indices = @transform_7, window_bounds = array<i64: 4, 1, 8>}, {pipeline_mode = #tpu.pipeline_mode<synchronous>, transform_indices = @transform_8, window_bounds = array<i64: 4, 8, 32>}, {pipeline_mode = #tpu.pipeline_mode<synchronous>, transform_indices = @transform_9, window_bounds = array<i64: 1, 32>}, {pipeline_mode = #tpu.pipeline_mode<synchronous>, transform_indices = @transform_10, window_bounds = array<i64: 1, 32>}, {pipeline_mode = #tpu.pipeline_mode<synchronous>, transform_indices = @transform_11, window_bounds = array<i64: 1, 32>}, {pipeline_mode = #tpu.pipeline_mode<synchronous>, transform_indices = @transform_12, window_bounds = array<i64: 1, 32>}, {pipeline_mode = #tpu.pipeline_mode<synchronous>, transform_indices = @transform_13, window_bounds = array<i64: 1, 32>}, {transform_indices = @transform_14, window_bounds = array<i64: 8, 2, 32>}]} {
    %c0 = arith.constant 0 : index
    %c0_0 = arith.constant 0 : index
    %c0_1 = arith.constant 0 : index
    %0 = vector.load %arg1[%c0, %c0_0, %c0_1] : memref<8x2x32xf32, #tpu.memory_space<vmem>>, vector<8x2x32xf32>
    %c0_2 = arith.constant 0 : index
    %c0_3 = arith.constant 0 : index
    %c0_4 = arith.constant 0 : index
    %1 = vector.load %arg2[%c0_2, %c0_3, %c0_4] : memref<8x2x32xf32, #tpu.memory_space<vmem>>, vector<8x2x32xf32>
    %2 = arith.addf %0, %1 : vector<8x2x32xf32>
    %3 = vector.extract_strided_slice %0 {offsets = [0, 0, 0], sizes = [8, 1, 32], strides = [1, 1, 1]} : vector<8x2x32xf32> to vector<8x1x32xf32>
    %4 = vector.shape_cast %3 : vector<8x1x32xf32> to vector<8x32xf32>
    %5 = vector.extract_strided_slice %0 {offsets = [0, 1, 0], sizes = [8, 1, 32], strides = [1, 1, 1]} : vector<8x2x32xf32> to vector<8x1x32xf32>
    %6 = vector.shape_cast %5 : vector<8x1x32xf32> to vector<8x32xf32>
    %7 = tpu.concatenate %4, %6 in 0 : vector<8x32xf32>, vector<8x32xf32> -> vector<16x32xf32>
    %8 = vector.extract_strided_slice %2 {offsets = [0, 0, 0], sizes = [8, 1, 32], strides = [1, 1, 1]} : vector<8x2x32xf32> to vector<8x1x32xf32>
    %9 = vector.shape_cast %8 : vector<8x1x32xf32> to vector<8x32xf32>
    %10 = vector.extract_strided_slice %2 {offsets = [0, 1, 0], sizes = [8, 1, 32], strides = [1, 1, 1]} : vector<8x2x32xf32> to vector<8x1x32xf32>
    %11 = vector.shape_cast %10 : vector<8x1x32xf32> to vector<8x32xf32>
    %12 = tpu.concatenate %9, %11 in 0 : vector<8x32xf32>, vector<8x32xf32> -> vector<16x32xf32>
    %13 = arith.truncf %12 : vector<16x32xf32> to vector<16x32xbf16>
    %14 = vector.extract_strided_slice %2 {offsets = [0, 0, 0], sizes = [8, 1, 32], strides = [1, 1, 1]} : vector<8x2x32xf32> to vector<8x1x32xf32>
    %15 = vector.shape_cast %14 : vector<8x1x32xf32> to vector<8x32xf32>
    %16 = vector.extract_strided_slice %2 {offsets = [0, 1, 0], sizes = [8, 1, 32], strides = [1, 1, 1]} : vector<8x2x32xf32> to vector<8x1x32xf32>
    %17 = vector.shape_cast %16 : vector<8x1x32xf32> to vector<8x32xf32>
    %18 = tpu.concatenate %15, %17 in 0 : vector<8x32xf32>, vector<8x32xf32> -> vector<16x32xf32>
    %19 = arith.truncf %18 : vector<16x32xf32> to vector<16x32xbf16>
    %20 = vector.extract_strided_slice %0 {offsets = [0, 0, 0], sizes = [8, 1, 32], strides = [1, 1, 1]} : vector<8x2x32xf32> to vector<8x1x32xf32>
    %21 = vector.shape_cast %20 : vector<8x1x32xf32> to vector<8x32xf32>
    %22 = vector.extract_strided_slice %0 {offsets = [0, 1, 0], sizes = [8, 1, 32], strides = [1, 1, 1]} : vector<8x2x32xf32> to vector<8x1x32xf32>
    %23 = vector.shape_cast %22 : vector<8x1x32xf32> to vector<8x32xf32>
    %24 = tpu.concatenate %21, %23 in 0 : vector<8x32xf32>, vector<8x32xf32> -> vector<16x32xf32>
    %25 = arith.truncf %24 : vector<16x32xf32> to vector<16x32xbf16>
    %cst = arith.constant 0.000000e+00 : f32
    %26 = vector.broadcast %cst : f32 to vector<16x32xf32>
    %c0_5 = arith.constant 0 : index
    %c0_6 = arith.constant 0 : index
    %c0_7 = arith.constant 0 : index
    %27 = vector.load %arg3[%c0_5, %c0_6, %c0_7] : memref<4x32x8xbf16, #tpu.memory_space<vmem>>, vector<1x32x8xbf16>
    %28 = vector.shape_cast %27 : vector<1x32x8xbf16> to vector<32x8xbf16>
    %cst_8 = arith.constant dense<0.000000e+00> : vector<16x8xf32>
    %29 = tpu.matmul %13, %28, %cst_8 {dimension_numbers = #tpu.dot_dimension_numbers<[1], [0], [0], [1], [0, 0, 1, 1], [], []>} : vector<16x32xbf16>, vector<32x8xbf16>, vector<16x8xf32> -> vector<16x8xf32>
    %c0_9 = arith.constant 0 : index
    %c0_10 = arith.constant 0 : index
    %c0_11 = arith.constant 0 : index
    %30 = vector.load %arg4[%c0_9, %c0_10, %c0_11] : memref<4x1x8xf32, #tpu.memory_space<vmem>>, vector<1x1x8xf32>
    %31 = vector.shape_cast %30 : vector<1x1x8xf32> to vector<1x8xf32>
    %32 = vector.broadcast %31 : vector<1x8xf32> to vector<16x8xf32>
    %33 = arith.addf %29, %32 : vector<16x8xf32>
    %34 = arith.truncf %33 : vector<16x8xf32> to vector<16x8xbf16>
    %35 = vector.shape_cast %34 : vector<16x8xbf16> to vector<2x8x8xbf16>
    %c0_12 = arith.constant 0 : index
    %c0_13 = arith.constant 0 : index
    %c0_14 = arith.constant 0 : index
    %36 = vector.load %arg5[%c0_12, %c0_13, %c0_14] : memref<4x32x8xbf16, #tpu.memory_space<vmem>>, vector<1x32x8xbf16>
    %37 = vector.shape_cast %36 : vector<1x32x8xbf16> to vector<32x8xbf16>
    %cst_15 = arith.constant dense<0.000000e+00> : vector<16x8xf32>
    %38 = tpu.matmul %19, %37, %cst_15 {dimension_numbers = #tpu.dot_dimension_numbers<[1], [0], [0], [1], [0, 0, 1, 1], [], []>} : vector<16x32xbf16>, vector<32x8xbf16>, vector<16x8xf32> -> vector<16x8xf32>
    %c0_16 = arith.constant 0 : index
    %c0_17 = arith.constant 0 : index
    %c0_18 = arith.constant 0 : index
    %39 = vector.load %arg6[%c0_16, %c0_17, %c0_18] : memref<4x1x8xf32, #tpu.memory_space<vmem>>, vector<1x1x8xf32>
    %40 = vector.shape_cast %39 : vector<1x1x8xf32> to vector<1x8xf32>
    %41 = vector.broadcast %40 : vector<1x8xf32> to vector<16x8xf32>
    %42 = arith.addf %38, %41 : vector<16x8xf32>
    %43 = arith.truncf %42 : vector<16x8xf32> to vector<16x8xbf16>
    %44 = vector.shape_cast %43 : vector<16x8xbf16> to vector<2x8x8xbf16>
    %c0_19 = arith.constant 0 : index
    %c0_20 = arith.constant 0 : index
    %c0_21 = arith.constant 0 : index
    %45 = vector.load %arg7[%c0_19, %c0_20, %c0_21] : memref<4x32x8xbf16, #tpu.memory_space<vmem>>, vector<1x32x8xbf16>
    %46 = vector.shape_cast %45 : vector<1x32x8xbf16> to vector<32x8xbf16>
    %cst_22 = arith.constant dense<0.000000e+00> : vector<16x8xf32>
    %47 = tpu.matmul %25, %46, %cst_22 {dimension_numbers = #tpu.dot_dimension_numbers<[1], [0], [0], [1], [0, 0, 1, 1], [], []>} : vector<16x32xbf16>, vector<32x8xbf16>, vector<16x8xf32> -> vector<16x8xf32>
    %c0_23 = arith.constant 0 : index
    %c0_24 = arith.constant 0 : index
    %c0_25 = arith.constant 0 : index
    %48 = vector.load %arg8[%c0_23, %c0_24, %c0_25] : memref<4x1x8xf32, #tpu.memory_space<vmem>>, vector<1x1x8xf32>
    %49 = vector.shape_cast %48 : vector<1x1x8xf32> to vector<1x8xf32>
    %50 = vector.broadcast %49 : vector<1x8xf32> to vector<16x8xf32>
    %51 = arith.addf %47, %50 : vector<16x8xf32>
    %52 = arith.truncf %51 : vector<16x8xf32> to vector<16x8xbf16>
    %53 = vector.shape_cast %52 : vector<16x8xbf16> to vector<2x8x8xbf16>
    "tpu.trace_start"() <{level = 10 : i32, message = "bqd,bkd->bqk"}> : () -> ()
    %cst_26 = arith.constant dense<0.000000e+00> : vector<2x8x8xf32>
    %54 = tpu.matmul %35, %44, %cst_26 {dimension_numbers = #tpu.dot_dimension_numbers<[2], [2], [1], [1], [0, 0, 0, 1, 1, 1], [0], [0]>} : vector<2x8x8xbf16>, vector<2x8x8xbf16>, vector<2x8x8xf32> -> vector<2x8x8xf32>
    "tpu.trace_stop"() : () -> ()
    %cst_27 = arith.constant dense<0xFF800000> : vector<2x8xf32>
    %55 = vector.multi_reduction <maximumf>, %54, %cst_27 [2] : vector<2x8x8xf32> to vector<2x8xf32>
    %56 = vector.shape_cast %55 : vector<2x8xf32> to vector<2x8x1xf32>
    %57 = vector.broadcast %56 : vector<2x8x1xf32> to vector<2x8x8xf32>
    %58 = arith.subf %54, %57 : vector<2x8x8xf32>
    %59 = math.exp %58 : vector<2x8x8xf32>
    %cst_28 = arith.constant dense<0.000000e+00> : vector<2x8xf32>
    %60 = vector.multi_reduction <add>, %59, %cst_28 [2] : vector<2x8x8xf32> to vector<2x8xf32>
    %61 = vector.shape_cast %60 : vector<2x8xf32> to vector<2x8x1xf32>
    %62 = tpu.reciprocal %61 {approx = true} : vector<2x8x1xf32> -> vector<2x8x1xf32>
    %63 = vector.broadcast %62 : vector<2x8x1xf32> to vector<2x8x8xf32>
    %64 = arith.mulf %59, %63 : vector<2x8x8xf32>
    %65 = arith.truncf %64 : vector<2x8x8xf32> to vector<2x8x8xbf16>
    "tpu.trace_start"() <{level = 10 : i32, message = "bqk,bkd->bqd"}> : () -> ()
    %cst_29 = arith.constant dense<0.000000e+00> : vector<2x8x8xf32>
    %66 = tpu.matmul %65, %53, %cst_29 {dimension_numbers = #tpu.dot_dimension_numbers<[2], [1], [1], [2], [0, 0, 0, 1, 1, 2], [0], [0]>} : vector<2x8x8xbf16>, vector<2x8x8xbf16>, vector<2x8x8xf32> -> vector<2x8x8xf32>
    "tpu.trace_stop"() : () -> ()
    %67 = arith.truncf %66 : vector<2x8x8xf32> to vector<2x8x8xbf16>
    %68 = vector.shape_cast %67 : vector<2x8x8xbf16> to vector<16x8xbf16>
    %c0_30 = arith.constant 0 : index
    %c0_31 = arith.constant 0 : index
    %c0_32 = arith.constant 0 : index
    %69 = vector.load %arg9[%c0_30, %c0_31, %c0_32] : memref<4x8x32xbf16, #tpu.memory_space<vmem>>, vector<1x8x32xbf16>
    %70 = vector.shape_cast %69 : vector<1x8x32xbf16> to vector<8x32xbf16>
    %cst_33 = arith.constant dense<0.000000e+00> : vector<16x32xf32>
    %71 = tpu.matmul %68, %70, %cst_33 {dimension_numbers = #tpu.dot_dimension_numbers<[1], [0], [0], [1], [0, 0, 1, 1], [], []>} : vector<16x8xbf16>, vector<8x32xbf16>, vector<16x32xf32> -> vector<16x32xf32>
    %72 = arith.addf %26, %71 : vector<16x32xf32>
    %c1 = arith.constant 1 : index
    %c0_34 = arith.constant 0 : index
    %c0_35 = arith.constant 0 : index
    %73 = vector.load %arg3[%c1, %c0_34, %c0_35] : memref<4x32x8xbf16, #tpu.memory_space<vmem>>, vector<1x32x8xbf16>
    %74 = vector.shape_cast %73 : vector<1x32x8xbf16> to vector<32x8xbf16>
    %cst_36 = arith.constant dense<0.000000e+00> : vector<16x8xf32>
    %75 = tpu.matmul %13, %74, %cst_36 {dimension_numbers = #tpu.dot_dimension_numbers<[1], [0], [0], [1], [0, 0, 1, 1], [], []>} : vector<16x32xbf16>, vector<32x8xbf16>, vector<16x8xf32> -> vector<16x8xf32>
    %c1_37 = arith.constant 1 : index
    %c0_38 = arith.constant 0 : index
    %c0_39 = arith.constant 0 : index
    %76 = vector.load %arg4[%c1_37, %c0_38, %c0_39] : memref<4x1x8xf32, #tpu.memory_space<vmem>>, vector<1x1x8xf32>
    %77 = vector.shape_cast %76 : vector<1x1x8xf32> to vector<1x8xf32>
    %78 = vector.broadcast %77 : vector<1x8xf32> to vector<16x8xf32>
    %79 = arith.addf %75, %78 : vector<16x8xf32>
    %80 = arith.truncf %79 : vector<16x8xf32> to vector<16x8xbf16>
    %81 = vector.shape_cast %80 : vector<16x8xbf16> to vector<2x8x8xbf16>
    %c1_40 = arith.constant 1 : index
    %c0_41 = arith.constant 0 : index
    %c0_42 = arith.constant 0 : index
    %82 = vector.load %arg5[%c1_40, %c0_41, %c0_42] : memref<4x32x8xbf16, #tpu.memory_space<vmem>>, vector<1x32x8xbf16>
    %83 = vector.shape_cast %82 : vector<1x32x8xbf16> to vector<32x8xbf16>
    %cst_43 = arith.constant dense<0.000000e+00> : vector<16x8xf32>
    %84 = tpu.matmul %19, %83, %cst_43 {dimension_numbers = #tpu.dot_dimension_numbers<[1], [0], [0], [1], [0, 0, 1, 1], [], []>} : vector<16x32xbf16>, vector<32x8xbf16>, vector<16x8xf32> -> vector<16x8xf32>
    %c1_44 = arith.constant 1 : index
    %c0_45 = arith.constant 0 : index
    %c0_46 = arith.constant 0 : index
    %85 = vector.load %arg6[%c1_44, %c0_45, %c0_46] : memref<4x1x8xf32, #tpu.memory_space<vmem>>, vector<1x1x8xf32>
    %86 = vector.shape_cast %85 : vector<1x1x8xf32> to vector<1x8xf32>
    %87 = vector.broadcast %86 : vector<1x8xf32> to vector<16x8xf32>
    %88 = arith.addf %84, %87 : vector<16x8xf32>
    %89 = arith.truncf %88 : vector<16x8xf32> to vector<16x8xbf16>
    %90 = vector.shape_cast %89 : vector<16x8xbf16> to vector<2x8x8xbf16>
    %c1_47 = arith.constant 1 : index
    %c0_48 = arith.constant 0 : index
    %c0_49 = arith.constant 0 : index
    %91 = vector.load %arg7[%c1_47, %c0_48, %c0_49] : memref<4x32x8xbf16, #tpu.memory_space<vmem>>, vector<1x32x8xbf16>
    %92 = vector.shape_cast %91 : vector<1x32x8xbf16> to vector<32x8xbf16>
    %cst_50 = arith.constant dense<0.000000e+00> : vector<16x8xf32>
    %93 = tpu.matmul %25, %92, %cst_50 {dimension_numbers = #tpu.dot_dimension_numbers<[1], [0], [0], [1], [0, 0, 1, 1], [], []>} : vector<16x32xbf16>, vector<32x8xbf16>, vector<16x8xf32> -> vector<16x8xf32>
    %c1_51 = arith.constant 1 : index
    %c0_52 = arith.constant 0 : index
    %c0_53 = arith.constant 0 : index
    %94 = vector.load %arg8[%c1_51, %c0_52, %c0_53] : memref<4x1x8xf32, #tpu.memory_space<vmem>>, vector<1x1x8xf32>
    %95 = vector.shape_cast %94 : vector<1x1x8xf32> to vector<1x8xf32>
    %96 = vector.broadcast %95 : vector<1x8xf32> to vector<16x8xf32>
    %97 = arith.addf %93, %96 : vector<16x8xf32>
    %98 = arith.truncf %97 : vector<16x8xf32> to vector<16x8xbf16>
    %99 = vector.shape_cast %98 : vector<16x8xbf16> to vector<2x8x8xbf16>
    "tpu.trace_start"() <{level = 10 : i32, message = "bqd,bkd->bqk"}> : () -> ()
    %cst_54 = arith.constant dense<0.000000e+00> : vector<2x8x8xf32>
    %100 = tpu.matmul %81, %90, %cst_54 {dimension_numbers = #tpu.dot_dimension_numbers<[2], [2], [1], [1], [0, 0, 0, 1, 1, 1], [0], [0]>} : vector<2x8x8xbf16>, vector<2x8x8xbf16>, vector<2x8x8xf32> -> vector<2x8x8xf32>
    "tpu.trace_stop"() : () -> ()
    %cst_55 = arith.constant dense<0xFF800000> : vector<2x8xf32>
    %101 = vector.multi_reduction <maximumf>, %100, %cst_55 [2] : vector<2x8x8xf32> to vector<2x8xf32>
    %102 = vector.shape_cast %101 : vector<2x8xf32> to vector<2x8x1xf32>
    %103 = vector.broadcast %102 : vector<2x8x1xf32> to vector<2x8x8xf32>
    %104 = arith.subf %100, %103 : vector<2x8x8xf32>
    %105 = math.exp %104 : vector<2x8x8xf32>
    %cst_56 = arith.constant dense<0.000000e+00> : vector<2x8xf32>
    %106 = vector.multi_reduction <add>, %105, %cst_56 [2] : vector<2x8x8xf32> to vector<2x8xf32>
    %107 = vector.shape_cast %106 : vector<2x8xf32> to vector<2x8x1xf32>
    %108 = tpu.reciprocal %107 {approx = true} : vector<2x8x1xf32> -> vector<2x8x1xf32>
    %109 = vector.broadcast %108 : vector<2x8x1xf32> to vector<2x8x8xf32>
    %110 = arith.mulf %105, %109 : vector<2x8x8xf32>
    %111 = arith.truncf %110 : vector<2x8x8xf32> to vector<2x8x8xbf16>
    "tpu.trace_start"() <{level = 10 : i32, message = "bqk,bkd->bqd"}> : () -> ()
    %cst_57 = arith.constant dense<0.000000e+00> : vector<2x8x8xf32>
    %112 = tpu.matmul %111, %99, %cst_57 {dimension_numbers = #tpu.dot_dimension_numbers<[2], [1], [1], [2], [0, 0, 0, 1, 1, 2], [0], [0]>} : vector<2x8x8xbf16>, vector<2x8x8xbf16>, vector<2x8x8xf32> -> vector<2x8x8xf32>
    "tpu.trace_stop"() : () -> ()
    %113 = arith.truncf %112 : vector<2x8x8xf32> to vector<2x8x8xbf16>
    %114 = vector.shape_cast %113 : vector<2x8x8xbf16> to vector<16x8xbf16>
    %c1_58 = arith.constant 1 : index
    %c0_59 = arith.constant 0 : index
    %c0_60 = arith.constant 0 : index
    %115 = vector.load %arg9[%c1_58, %c0_59, %c0_60] : memref<4x8x32xbf16, #tpu.memory_space<vmem>>, vector<1x8x32xbf16>
    %116 = vector.shape_cast %115 : vector<1x8x32xbf16> to vector<8x32xbf16>
    %cst_61 = arith.constant dense<0.000000e+00> : vector<16x32xf32>
    %117 = tpu.matmul %114, %116, %cst_61 {dimension_numbers = #tpu.dot_dimension_numbers<[1], [0], [0], [1], [0, 0, 1, 1], [], []>} : vector<16x8xbf16>, vector<8x32xbf16>, vector<16x32xf32> -> vector<16x32xf32>
    %118 = arith.addf %72, %117 : vector<16x32xf32>
    %c2 = arith.constant 2 : index
    %c0_62 = arith.constant 0 : index
    %c0_63 = arith.constant 0 : index
    %119 = vector.load %arg3[%c2, %c0_62, %c0_63] : memref<4x32x8xbf16, #tpu.memory_space<vmem>>, vector<1x32x8xbf16>
    %120 = vector.shape_cast %119 : vector<1x32x8xbf16> to vector<32x8xbf16>
    %cst_64 = arith.constant dense<0.000000e+00> : vector<16x8xf32>
    %121 = tpu.matmul %13, %120, %cst_64 {dimension_numbers = #tpu.dot_dimension_numbers<[1], [0], [0], [1], [0, 0, 1, 1], [], []>} : vector<16x32xbf16>, vector<32x8xbf16>, vector<16x8xf32> -> vector<16x8xf32>
    %c2_65 = arith.constant 2 : index
    %c0_66 = arith.constant 0 : index
    %c0_67 = arith.constant 0 : index
    %122 = vector.load %arg4[%c2_65, %c0_66, %c0_67] : memref<4x1x8xf32, #tpu.memory_space<vmem>>, vector<1x1x8xf32>
    %123 = vector.shape_cast %122 : vector<1x1x8xf32> to vector<1x8xf32>
    %124 = vector.broadcast %123 : vector<1x8xf32> to vector<16x8xf32>
    %125 = arith.addf %121, %124 : vector<16x8xf32>
    %126 = arith.truncf %125 : vector<16x8xf32> to vector<16x8xbf16>
    %127 = vector.shape_cast %126 : vector<16x8xbf16> to vector<2x8x8xbf16>
    %c2_68 = arith.constant 2 : index
    %c0_69 = arith.constant 0 : index
    %c0_70 = arith.constant 0 : index
    %128 = vector.load %arg5[%c2_68, %c0_69, %c0_70] : memref<4x32x8xbf16, #tpu.memory_space<vmem>>, vector<1x32x8xbf16>
    %129 = vector.shape_cast %128 : vector<1x32x8xbf16> to vector<32x8xbf16>
    %cst_71 = arith.constant dense<0.000000e+00> : vector<16x8xf32>
    %130 = tpu.matmul %19, %129, %cst_71 {dimension_numbers = #tpu.dot_dimension_numbers<[1], [0], [0], [1], [0, 0, 1, 1], [], []>} : vector<16x32xbf16>, vector<32x8xbf16>, vector<16x8xf32> -> vector<16x8xf32>
    %c2_72 = arith.constant 2 : index
    %c0_73 = arith.constant 0 : index
    %c0_74 = arith.constant 0 : index
    %131 = vector.load %arg6[%c2_72, %c0_73, %c0_74] : memref<4x1x8xf32, #tpu.memory_space<vmem>>, vector<1x1x8xf32>
    %132 = vector.shape_cast %131 : vector<1x1x8xf32> to vector<1x8xf32>
    %133 = vector.broadcast %132 : vector<1x8xf32> to vector<16x8xf32>
    %134 = arith.addf %130, %133 : vector<16x8xf32>
    %135 = arith.truncf %134 : vector<16x8xf32> to vector<16x8xbf16>
    %136 = vector.shape_cast %135 : vector<16x8xbf16> to vector<2x8x8xbf16>
    %c2_75 = arith.constant 2 : index
    %c0_76 = arith.constant 0 : index
    %c0_77 = arith.constant 0 : index
    %137 = vector.load %arg7[%c2_75, %c0_76, %c0_77] : memref<4x32x8xbf16, #tpu.memory_space<vmem>>, vector<1x32x8xbf16>
    %138 = vector.shape_cast %137 : vector<1x32x8xbf16> to vector<32x8xbf16>
    %cst_78 = arith.constant dense<0.000000e+00> : vector<16x8xf32>
    %139 = tpu.matmul %25, %138, %cst_78 {dimension_numbers = #tpu.dot_dimension_numbers<[1], [0], [0], [1], [0, 0, 1, 1], [], []>} : vector<16x32xbf16>, vector<32x8xbf16>, vector<16x8xf32> -> vector<16x8xf32>
    %c2_79 = arith.constant 2 : index
    %c0_80 = arith.constant 0 : index
    %c0_81 = arith.constant 0 : index
    %140 = vector.load %arg8[%c2_79, %c0_80, %c0_81] : memref<4x1x8xf32, #tpu.memory_space<vmem>>, vector<1x1x8xf32>
    %141 = vector.shape_cast %140 : vector<1x1x8xf32> to vector<1x8xf32>
    %142 = vector.broadcast %141 : vector<1x8xf32> to vector<16x8xf32>
    %143 = arith.addf %139, %142 : vector<16x8xf32>
    %144 = arith.truncf %143 : vector<16x8xf32> to vector<16x8xbf16>
    %145 = vector.shape_cast %144 : vector<16x8xbf16> to vector<2x8x8xbf16>
    "tpu.trace_start"() <{level = 10 : i32, message = "bqd,bkd->bqk"}> : () -> ()
    %cst_82 = arith.constant dense<0.000000e+00> : vector<2x8x8xf32>
    %146 = tpu.matmul %127, %136, %cst_82 {dimension_numbers = #tpu.dot_dimension_numbers<[2], [2], [1], [1], [0, 0, 0, 1, 1, 1], [0], [0]>} : vector<2x8x8xbf16>, vector<2x8x8xbf16>, vector<2x8x8xf32> -> vector<2x8x8xf32>
    "tpu.trace_stop"() : () -> ()
    %cst_83 = arith.constant dense<0xFF800000> : vector<2x8xf32>
    %147 = vector.multi_reduction <maximumf>, %146, %cst_83 [2] : vector<2x8x8xf32> to vector<2x8xf32>
    %148 = vector.shape_cast %147 : vector<2x8xf32> to vector<2x8x1xf32>
    %149 = vector.broadcast %148 : vector<2x8x1xf32> to vector<2x8x8xf32>
    %150 = arith.subf %146, %149 : vector<2x8x8xf32>
    %151 = math.exp %150 : vector<2x8x8xf32>
    %cst_84 = arith.constant dense<0.000000e+00> : vector<2x8xf32>
    %152 = vector.multi_reduction <add>, %151, %cst_84 [2] : vector<2x8x8xf32> to vector<2x8xf32>
    %153 = vector.shape_cast %152 : vector<2x8xf32> to vector<2x8x1xf32>
    %154 = tpu.reciprocal %153 {approx = true} : vector<2x8x1xf32> -> vector<2x8x1xf32>
    %155 = vector.broadcast %154 : vector<2x8x1xf32> to vector<2x8x8xf32>
    %156 = arith.mulf %151, %155 : vector<2x8x8xf32>
    %157 = arith.truncf %156 : vector<2x8x8xf32> to vector<2x8x8xbf16>
    "tpu.trace_start"() <{level = 10 : i32, message = "bqk,bkd->bqd"}> : () -> ()
    %cst_85 = arith.constant dense<0.000000e+00> : vector<2x8x8xf32>
    %158 = tpu.matmul %157, %145, %cst_85 {dimension_numbers = #tpu.dot_dimension_numbers<[2], [1], [1], [2], [0, 0, 0, 1, 1, 2], [0], [0]>} : vector<2x8x8xbf16>, vector<2x8x8xbf16>, vector<2x8x8xf32> -> vector<2x8x8xf32>
    "tpu.trace_stop"() : () -> ()
    %159 = arith.truncf %158 : vector<2x8x8xf32> to vector<2x8x8xbf16>
    %160 = vector.shape_cast %159 : vector<2x8x8xbf16> to vector<16x8xbf16>
    %c2_86 = arith.constant 2 : index
    %c0_87 = arith.constant 0 : index
    %c0_88 = arith.constant 0 : index
    %161 = vector.load %arg9[%c2_86, %c0_87, %c0_88] : memref<4x8x32xbf16, #tpu.memory_space<vmem>>, vector<1x8x32xbf16>
    %162 = vector.shape_cast %161 : vector<1x8x32xbf16> to vector<8x32xbf16>
    %cst_89 = arith.constant dense<0.000000e+00> : vector<16x32xf32>
    %163 = tpu.matmul %160, %162, %cst_89 {dimension_numbers = #tpu.dot_dimension_numbers<[1], [0], [0], [1], [0, 0, 1, 1], [], []>} : vector<16x8xbf16>, vector<8x32xbf16>, vector<16x32xf32> -> vector<16x32xf32>
    %164 = arith.addf %118, %163 : vector<16x32xf32>
    %c3 = arith.constant 3 : index
    %c0_90 = arith.constant 0 : index
    %c0_91 = arith.constant 0 : index
    %165 = vector.load %arg3[%c3, %c0_90, %c0_91] : memref<4x32x8xbf16, #tpu.memory_space<vmem>>, vector<1x32x8xbf16>
    %166 = vector.shape_cast %165 : vector<1x32x8xbf16> to vector<32x8xbf16>
    %cst_92 = arith.constant dense<0.000000e+00> : vector<16x8xf32>
    %167 = tpu.matmul %13, %166, %cst_92 {dimension_numbers = #tpu.dot_dimension_numbers<[1], [0], [0], [1], [0, 0, 1, 1], [], []>} : vector<16x32xbf16>, vector<32x8xbf16>, vector<16x8xf32> -> vector<16x8xf32>
    %c3_93 = arith.constant 3 : index
    %c0_94 = arith.constant 0 : index
    %c0_95 = arith.constant 0 : index
    %168 = vector.load %arg4[%c3_93, %c0_94, %c0_95] : memref<4x1x8xf32, #tpu.memory_space<vmem>>, vector<1x1x8xf32>
    %169 = vector.shape_cast %168 : vector<1x1x8xf32> to vector<1x8xf32>
    %170 = vector.broadcast %169 : vector<1x8xf32> to vector<16x8xf32>
    %171 = arith.addf %167, %170 : vector<16x8xf32>
    %172 = arith.truncf %171 : vector<16x8xf32> to vector<16x8xbf16>
    %173 = vector.shape_cast %172 : vector<16x8xbf16> to vector<2x8x8xbf16>
    %c3_96 = arith.constant 3 : index
    %c0_97 = arith.constant 0 : index
    %c0_98 = arith.constant 0 : index
    %174 = vector.load %arg5[%c3_96, %c0_97, %c0_98] : memref<4x32x8xbf16, #tpu.memory_space<vmem>>, vector<1x32x8xbf16>
    %175 = vector.shape_cast %174 : vector<1x32x8xbf16> to vector<32x8xbf16>
    %cst_99 = arith.constant dense<0.000000e+00> : vector<16x8xf32>
    %176 = tpu.matmul %19, %175, %cst_99 {dimension_numbers = #tpu.dot_dimension_numbers<[1], [0], [0], [1], [0, 0, 1, 1], [], []>} : vector<16x32xbf16>, vector<32x8xbf16>, vector<16x8xf32> -> vector<16x8xf32>
    %c3_100 = arith.constant 3 : index
    %c0_101 = arith.constant 0 : index
    %c0_102 = arith.constant 0 : index
    %177 = vector.load %arg6[%c3_100, %c0_101, %c0_102] : memref<4x1x8xf32, #tpu.memory_space<vmem>>, vector<1x1x8xf32>
    %178 = vector.shape_cast %177 : vector<1x1x8xf32> to vector<1x8xf32>
    %179 = vector.broadcast %178 : vector<1x8xf32> to vector<16x8xf32>
    %180 = arith.addf %176, %179 : vector<16x8xf32>
    %181 = arith.truncf %180 : vector<16x8xf32> to vector<16x8xbf16>
    %182 = vector.shape_cast %181 : vector<16x8xbf16> to vector<2x8x8xbf16>
    %c3_103 = arith.constant 3 : index
    %c0_104 = arith.constant 0 : index
    %c0_105 = arith.constant 0 : index
    %183 = vector.load %arg7[%c3_103, %c0_104, %c0_105] : memref<4x32x8xbf16, #tpu.memory_space<vmem>>, vector<1x32x8xbf16>
    %184 = vector.shape_cast %183 : vector<1x32x8xbf16> to vector<32x8xbf16>
    %cst_106 = arith.constant dense<0.000000e+00> : vector<16x8xf32>
    %185 = tpu.matmul %25, %184, %cst_106 {dimension_numbers = #tpu.dot_dimension_numbers<[1], [0], [0], [1], [0, 0, 1, 1], [], []>} : vector<16x32xbf16>, vector<32x8xbf16>, vector<16x8xf32> -> vector<16x8xf32>
    %c3_107 = arith.constant 3 : index
    %c0_108 = arith.constant 0 : index
    %c0_109 = arith.constant 0 : index
    %186 = vector.load %arg8[%c3_107, %c0_108, %c0_109] : memref<4x1x8xf32, #tpu.memory_space<vmem>>, vector<1x1x8xf32>
    %187 = vector.shape_cast %186 : vector<1x1x8xf32> to vector<1x8xf32>
    %188 = vector.broadcast %187 : vector<1x8xf32> to vector<16x8xf32>
    %189 = arith.addf %185, %188 : vector<16x8xf32>
    %190 = arith.truncf %189 : vector<16x8xf32> to vector<16x8xbf16>
    %191 = vector.shape_cast %190 : vector<16x8xbf16> to vector<2x8x8xbf16>
    "tpu.trace_start"() <{level = 10 : i32, message = "bqd,bkd->bqk"}> : () -> ()
    %cst_110 = arith.constant dense<0.000000e+00> : vector<2x8x8xf32>
    %192 = tpu.matmul %173, %182, %cst_110 {dimension_numbers = #tpu.dot_dimension_numbers<[2], [2], [1], [1], [0, 0, 0, 1, 1, 1], [0], [0]>} : vector<2x8x8xbf16>, vector<2x8x8xbf16>, vector<2x8x8xf32> -> vector<2x8x8xf32>
    "tpu.trace_stop"() : () -> ()
    %cst_111 = arith.constant dense<0xFF800000> : vector<2x8xf32>
    %193 = vector.multi_reduction <maximumf>, %192, %cst_111 [2] : vector<2x8x8xf32> to vector<2x8xf32>
    %194 = vector.shape_cast %193 : vector<2x8xf32> to vector<2x8x1xf32>
    %195 = vector.broadcast %194 : vector<2x8x1xf32> to vector<2x8x8xf32>
    %196 = arith.subf %192, %195 : vector<2x8x8xf32>
    %197 = math.exp %196 : vector<2x8x8xf32>
    %cst_112 = arith.constant dense<0.000000e+00> : vector<2x8xf32>
    %198 = vector.multi_reduction <add>, %197, %cst_112 [2] : vector<2x8x8xf32> to vector<2x8xf32>
    %199 = vector.shape_cast %198 : vector<2x8xf32> to vector<2x8x1xf32>
    %200 = tpu.reciprocal %199 {approx = true} : vector<2x8x1xf32> -> vector<2x8x1xf32>
    %201 = vector.broadcast %200 : vector<2x8x1xf32> to vector<2x8x8xf32>
    %202 = arith.mulf %197, %201 : vector<2x8x8xf32>
    %203 = arith.truncf %202 : vector<2x8x8xf32> to vector<2x8x8xbf16>
    "tpu.trace_start"() <{level = 10 : i32, message = "bqk,bkd->bqd"}> : () -> ()
    %cst_113 = arith.constant dense<0.000000e+00> : vector<2x8x8xf32>
    %204 = tpu.matmul %203, %191, %cst_113 {dimension_numbers = #tpu.dot_dimension_numbers<[2], [1], [1], [2], [0, 0, 0, 1, 1, 2], [0], [0]>} : vector<2x8x8xbf16>, vector<2x8x8xbf16>, vector<2x8x8xf32> -> vector<2x8x8xf32>
    "tpu.trace_stop"() : () -> ()
    %205 = arith.truncf %204 : vector<2x8x8xf32> to vector<2x8x8xbf16>
    %206 = vector.shape_cast %205 : vector<2x8x8xbf16> to vector<16x8xbf16>
    %c3_114 = arith.constant 3 : index
    %c0_115 = arith.constant 0 : index
    %c0_116 = arith.constant 0 : index
    %207 = vector.load %arg9[%c3_114, %c0_115, %c0_116] : memref<4x8x32xbf16, #tpu.memory_space<vmem>>, vector<1x8x32xbf16>
    %208 = vector.shape_cast %207 : vector<1x8x32xbf16> to vector<8x32xbf16>
    %cst_117 = arith.constant dense<0.000000e+00> : vector<16x32xf32>
    %209 = tpu.matmul %206, %208, %cst_117 {dimension_numbers = #tpu.dot_dimension_numbers<[1], [0], [0], [1], [0, 0, 1, 1], [], []>} : vector<16x8xbf16>, vector<8x32xbf16>, vector<16x32xf32> -> vector<16x32xf32>
    %210 = arith.addf %164, %209 : vector<16x32xf32>
    %211 = arith.addf %7, %210 : vector<16x32xf32>
    %c0_118 = arith.constant 0 : index
    %c0_119 = arith.constant 0 : index
    %212 = vector.load %arg10[%c0_118, %c0_119] : memref<1x32xf32, #tpu.memory_space<vmem>>, vector<1x32xf32>
    %213 = vector.broadcast %212 : vector<1x32xf32> to vector<16x32xf32>
    %214 = arith.addf %211, %213 : vector<16x32xf32>
    %c0_120 = arith.constant 0 : index
    %c0_121 = arith.constant 0 : index
    %215 = vector.load %arg11[%c0_120, %c0_121] : memref<1x32xf32, #tpu.memory_space<vmem>>, vector<1x32xf32>
    %c0_122 = arith.constant 0 : index
    %c0_123 = arith.constant 0 : index
    %216 = vector.load %arg12[%c0_122, %c0_123] : memref<1x32xf32, #tpu.memory_space<vmem>>, vector<1x32xf32>
    %cst_124 = arith.constant dense<0.000000e+00> : vector<16xf32>
    %217 = vector.multi_reduction <add>, %214, %cst_124 [1] : vector<16x32xf32> to vector<16xf32>
    %218 = vector.shape_cast %217 : vector<16xf32> to vector<16x1xf32>
    %cst_125 = arith.constant 3.200000e+01 : f32
    %219 = vector.broadcast %cst_125 : f32 to vector<16x1xf32>
    %220 = arith.divf %218, %219 : vector<16x1xf32>
    %221 = vector.broadcast %220 : vector<16x1xf32> to vector<16x32xf32>
    %222 = arith.subf %214, %221 : vector<16x32xf32>
    %223 = arith.mulf %222, %222 : vector<16x32xf32>
    %cst_126 = arith.constant dense<0.000000e+00> : vector<16xf32>
    %224 = vector.multi_reduction <add>, %223, %cst_126 [1] : vector<16x32xf32> to vector<16xf32>
    %225 = vector.shape_cast %224 : vector<16xf32> to vector<16x1xf32>
    %cst_127 = arith.constant 3.200000e+01 : f32
    %226 = vector.broadcast %cst_127 : f32 to vector<16x1xf32>
    %227 = arith.divf %225, %226 : vector<16x1xf32>
    %cst_128 = arith.constant 9.99999974E-6 : f32
    %228 = vector.broadcast %cst_128 : f32 to vector<16x1xf32>
    %229 = arith.addf %227, %228 : vector<16x1xf32>
    %230 = math.rsqrt %229 : vector<16x1xf32>
    %231 = vector.broadcast %230 : vector<16x1xf32> to vector<16x32xf32>
    %232 = arith.mulf %222, %231 : vector<16x32xf32>
    %233 = vector.broadcast %215 : vector<1x32xf32> to vector<16x32xf32>
    %234 = arith.mulf %232, %233 : vector<16x32xf32>
    %235 = vector.broadcast %216 : vector<1x32xf32> to vector<16x32xf32>
    %236 = arith.addf %234, %235 : vector<16x32xf32>
    %c0_129 = arith.constant 0 : index
    %c0_130 = arith.constant 0 : index
    %237 = vector.load %arg13[%c0_129, %c0_130] : memref<1x32xf32, #tpu.memory_space<vmem>>, vector<1x32xf32>
    %c0_131 = arith.constant 0 : index
    %c0_132 = arith.constant 0 : index
    %238 = vector.load %arg14[%c0_131, %c0_132] : memref<1x32xf32, #tpu.memory_space<vmem>>, vector<1x32xf32>
    %cst_133 = arith.constant dense<0.000000e+00> : vector<16xf32>
    %239 = vector.multi_reduction <add>, %236, %cst_133 [1] : vector<16x32xf32> to vector<16xf32>
    %240 = vector.shape_cast %239 : vector<16xf32> to vector<16x1xf32>
    %cst_134 = arith.constant 3.200000e+01 : f32
    %241 = vector.broadcast %cst_134 : f32 to vector<16x1xf32>
    %242 = arith.divf %240, %241 : vector<16x1xf32>
    %243 = vector.broadcast %242 : vector<16x1xf32> to vector<16x32xf32>
    %244 = arith.subf %236, %243 : vector<16x32xf32>
    %245 = arith.mulf %244, %244 : vector<16x32xf32>
    %cst_135 = arith.constant dense<0.000000e+00> : vector<16xf32>
    %246 = vector.multi_reduction <add>, %245, %cst_135 [1] : vector<16x32xf32> to vector<16xf32>
    %247 = vector.shape_cast %246 : vector<16xf32> to vector<16x1xf32>
    %cst_136 = arith.constant 3.200000e+01 : f32
    %248 = vector.broadcast %cst_136 : f32 to vector<16x1xf32>
    %249 = arith.divf %247, %248 : vector<16x1xf32>
    %cst_137 = arith.constant 2.500000e-06 : f32
    %250 = vector.broadcast %cst_137 : f32 to vector<16x1xf32>
    %251 = arith.addf %249, %250 : vector<16x1xf32>
    %252 = math.rsqrt %251 : vector<16x1xf32>
    %253 = vector.broadcast %252 : vector<16x1xf32> to vector<16x32xf32>
    %254 = arith.mulf %244, %253 : vector<16x32xf32>
    %255 = vector.broadcast %237 : vector<1x32xf32> to vector<16x32xf32>
    %256 = arith.mulf %254, %255 : vector<16x32xf32>
    %257 = vector.broadcast %238 : vector<1x32xf32> to vector<16x32xf32>
    %258 = arith.addf %256, %257 : vector<16x32xf32>
    %259 = vector.extract_strided_slice %258 {offsets = [0, 0], sizes = [8, 32], strides = [1, 1]} : vector<16x32xf32> to vector<8x32xf32>
    %c0_138 = arith.constant 0 : index
    %c0_139 = arith.constant 0 : index
    %c0_140 = arith.constant 0 : index
    %260 = vector.load %arg15[%c0_138, %c0_139, %c0_140] : memref<8x2x32xf32, #tpu.memory_space<vmem>>, vector<8x1x32xf32>
    %261 = vector.shape_cast %260 : vector<8x1x32xf32> to vector<8x32xf32>
    %262 = vector.shape_cast %259 : vector<8x32xf32> to vector<8x1x32xf32>
    tpu.vector_store %arg15[%c0_138, %c0_139, %c0_140], %262 {strides = array<i32>} : memref<8x2x32xf32, #tpu.memory_space<vmem>>, vector<8x1x32xf32>,
    %263 = vector.extract_strided_slice %258 {offsets = [8, 0], sizes = [8, 32], strides = [1, 1]} : vector<16x32xf32> to vector<8x32xf32>
    %c0_141 = arith.constant 0 : index
    %c1_142 = arith.constant 1 : index
    %c0_143 = arith.constant 0 : index
    %264 = vector.load %arg15[%c0_141, %c1_142, %c0_143] : memref<8x2x32xf32, #tpu.memory_space<vmem>>, vector<8x1x32xf32>
    %265 = vector.shape_cast %264 : vector<8x1x32xf32> to vector<8x32xf32>
    %266 = vector.shape_cast %263 : vector<8x32xf32> to vector<8x1x32xf32>
    tpu.vector_store %arg15[%c0_141, %c1_142, %c0_143], %266 {strides = array<i32>} : memref<8x2x32xf32, #tpu.memory_space<vmem>>, vector<8x1x32xf32>,
    return
  }
  func.func @transform_0(%arg0: i32) -> (i32, i32, i32) {
    %c0_i32 = arith.constant 0 : i32
    %c0_i32_0 = arith.constant 0 : i32
    %c0_i32_1 = arith.constant 0 : i32
    return %arg0, %c0_i32, %c0_i32_0 : i32, i32, i32
  }
  func.func @transform_1(%arg0: i32) -> (i32, i32, i32) {
    %c0_i32 = arith.constant 0 : i32
    %c0_i32_0 = arith.constant 0 : i32
    %c0_i32_1 = arith.constant 0 : i32
    return %arg0, %c0_i32, %c0_i32_0 : i32, i32, i32
  }
  func.func @transform_2(%arg0: i32) -> (i32, i32, i32) {
    %c0_i32 = arith.constant 0 : i32
    %c0_i32_0 = arith.constant 0 : i32
    %c0_i32_1 = arith.constant 0 : i32
    %c0_i32_2 = arith.constant 0 : i32
    return %c0_i32, %c0_i32_0, %c0_i32_1 : i32, i32, i32
  }
  func.func @transform_3(%arg0: i32) -> (i32, i32, i32) {
    %c0_i32 = arith.constant 0 : i32
    %c0_i32_0 = arith.constant 0 : i32
    %c0_i32_1 = arith.constant 0 : i32
    %c0_i32_2 = arith.constant 0 : i32
    return %c0_i32, %c0_i32_0, %c0_i32_1 : i32, i32, i32
  }
  func.func @transform_4(%arg0: i32) -> (i32, i32, i32) {
    %c0_i32 = arith.constant 0 : i32
    %c0_i32_0 = arith.constant 0 : i32
    %c0_i32_1 = arith.constant 0 : i32
    %c0_i32_2 = arith.constant 0 : i32
    return %c0_i32, %c0_i32_0, %c0_i32_1 : i32, i32, i32
  }
  func.func @transform_5(%arg0: i32) -> (i32, i32, i32) {
    %c0_i32 = arith.constant 0 : i32
    %c0_i32_0 = arith.constant 0 : i32
    %c0_i32_1 = arith.constant 0 : i32
    %c0_i32_2 = arith.constant 0 : i32
    return %c0_i32, %c0_i32_0, %c0_i32_1 : i32, i32, i32
  }
  func.func @transform_6(%arg0: i32) -> (i32, i32, i32) {
    %c0_i32 = arith.constant 0 : i32
    %c0_i32_0 = arith.constant 0 : i32
    %c0_i32_1 = arith.constant 0 : i32
    %c0_i32_2 = arith.constant 0 : i32
    return %c0_i32, %c0_i32_0, %c0_i32_1 : i32, i32, i32
  }
  func.func @transform_7(%arg0: i32) -> (i32, i32, i32) {
    %c0_i32 = arith.constant 0 : i32
    %c0_i32_0 = arith.constant 0 : i32
    %c0_i32_1 = arith.constant 0 : i32
    %c0_i32_2 = arith.constant 0 : i32
    return %c0_i32, %c0_i32_0, %c0_i32_1 : i32, i32, i32
  }
  func.func @transform_8(%arg0: i32) -> (i32, i32, i32) {
    %c0_i32 = arith.constant 0 : i32
    %c0_i32_0 = arith.constant 0 : i32
    %c0_i32_1 = arith.constant 0 : i32
    %c0_i32_2 = arith.constant 0 : i32
    return %c0_i32, %c0_i32_0, %c0_i32_1 : i32, i32, i32
  }
  func.func @transform_9(%arg0: i32) -> (i32, i32) {
    %c0_i32 = arith.constant 0 : i32
    %c0_i32_0 = arith.constant 0 : i32
    %c0_i32_1 = arith.constant 0 : i32
    return %c0_i32, %c0_i32_0 : i32, i32
  }
  func.func @transform_10(%arg0: i32) -> (i32, i32) {
    %c0_i32 = arith.constant 0 : i32
    %c0_i32_0 = arith.constant 0 : i32
    %c0_i32_1 = arith.constant 0 : i32
    return %c0_i32, %c0_i32_0 : i32, i32
  }
  func.func @transform_11(%arg0: i32) -> (i32, i32) {
    %c0_i32 = arith.constant 0 : i32
    %c0_i32_0 = arith.constant 0 : i32
    %c0_i32_1 = arith.constant 0 : i32
    return %c0_i32, %c0_i32_0 : i32, i32
  }
  func.func @transform_12(%arg0: i32) -> (i32, i32) {
    %c0_i32 = arith.constant 0 : i32
    %c0_i32_0 = arith.constant 0 : i32
    %c0_i32_1 = arith.constant 0 : i32
    return %c0_i32, %c0_i32_0 : i32, i32
  }
  func.func @transform_13(%arg0: i32) -> (i32, i32) {
    %c0_i32 = arith.constant 0 : i32
    %c0_i32_0 = arith.constant 0 : i32
    %c0_i32_1 = arith.constant 0 : i32
    return %c0_i32, %c0_i32_0 : i32, i32
  }
  func.func @transform_14(%arg0: i32) -> (i32, i32, i32) {
    %c0_i32 = arith.constant 0 : i32
    %c0_i32_0 = arith.constant 0 : i32
    %c0_i32_1 = arith.constant 0 : i32
    return %arg0, %c0_i32, %c0_i32_0 : i32, i32, i32
  }
}

</mosaic_0001>

<llo_original>
// kernel: tpu_custom_call.1
$region0: #{tpu_custom_call.1}
  #allocation0 [shape = 'u32[]', space=smem, size = 0x4, offset = 0x4, fixed_abs, tag = 'smem constant byte address 0x4 - core index']
  #allocation1 [shape = 'u32[144,128]{1,0:T(1,128)}', space=vmem, size = 0x12000, scoped, tag = 'internal scratch']
  %s0 = inlined_call_operand.vmem [shape: f32[8,2,32], index: 0, kind: input, shape index: {}]
  %s1 = inlined_call_operand.vmem [shape: f32[8,2,32], index: 1, kind: input, shape index: {}]
  %s2 = inlined_call_operand.vmem [shape: bf16[4,32,8], index: 2, kind: input, shape index: {}]
  %s3 = inlined_call_operand.vmem [shape: f32[4,1,8], index: 3, kind: input, shape index: {}]
  %s4 = inlined_call_operand.vmem [shape: bf16[4,32,8], index: 4, kind: input, shape index: {}]
  %s5 = inlined_call_operand.vmem [shape: f32[4,1,8], index: 5, kind: input, shape index: {}]
  %s6 = inlined_call_operand.vmem [shape: bf16[4,32,8], index: 6, kind: input, shape index: {}]
  %s7 = inlined_call_operand.vmem [shape: f32[4,1,8], index: 7, kind: input, shape index: {}]
  %s8 = inlined_call_operand.vmem [shape: bf16[4,8,32], index: 8, kind: input, shape index: {}]
  %s9 = inlined_call_operand.vmem [shape: f32[1,32], index: 9, kind: input, shape index: {}]
  %s10 = inlined_call_operand.vmem [shape: f32[1,32], index: 10, kind: input, shape index: {}]
  %s11 = inlined_call_operand.vmem [shape: f32[1,32], index: 11, kind: input, shape index: {}]
  %s12 = inlined_call_operand.vmem [shape: f32[1,32], index: 12, kind: input, shape index: {}]
  %s13 = inlined_call_operand.vmem [shape: f32[1,32], index: 13, kind: input, shape index: {}]
  %s14 = inlined_call_operand.hbm [shape: f32[8,2,32], index: 14, kind: output, shape index: {}]
  %s15 = sld [smem:[#allocation0]]
  $region66: #{tpu_custom_call.1} parent=0
    _
  %s17 = ssub.s32 1, %s15
  %s18 = scalar_select 0, %s17, %s15
  $region1: #{tpu_custom_call.1} parent=0
    #allocation2 [shape = 'u8[8192]{0}', space=vmem, size = 0x2000, scoped, tag = 'output window, operand 0, single buffered']
    #allocation3 [shape = 's32[1]{0}', space=sflag, size = 0x4, scoped, tag = 'scoped memory for tpu_custom_call.1']
    %19 = vsyncpa [#allocation3], 0
    // Predicated region
    $region2: #{tpu_custom_call.1} parent=1 // pred_check
      _
    $region3: #{tpu_custom_call.1} parent=1 // pred_check_branch
      %21 = sbr.rel (0) target = $region5
    $region4: #{tpu_custom_call.1} parent=1 // pred_region
      _
    $region5: #{tpu_custom_call.1} parent=1 // pred_fallthru
      _
    // Predicated region
    $region6: #{tpu_custom_call.1} parent=1 // pred_check
      _
    $region7: #{tpu_custom_call.1} parent=1 // pred_check_branch
      %23 = sbr.rel (0) target = $region9
    $region8: #{tpu_custom_call.1} parent=1 // pred_region
      _
    $region9: #{tpu_custom_call.1} parent=1 // pred_fallthru
      _
    // Predicated region
    $region10: #{tpu_custom_call.1} parent=1 // pred_check
      _
    $region11: #{tpu_custom_call.1} parent=1 // pred_check_branch
      %25 = sbr.rel (0) target = $region13
    $region12: #{tpu_custom_call.1} parent=1 // pred_region
      _
    $region13: #{tpu_custom_call.1} parent=1 // pred_fallthru
      _
    // Predicated region
    $region14: #{tpu_custom_call.1} parent=1 // pred_check
      _
    $region15: #{tpu_custom_call.1} parent=1 // pred_check_branch
      %27 = sbr.rel (0) target = $region17
    $region16: #{tpu_custom_call.1} parent=1 // pred_region
      _
    $region17: #{tpu_custom_call.1} parent=1 // pred_fallthru
      _
    // Predicated region
    $region18: #{tpu_custom_call.1} parent=1 // pred_check
      _
    $region19: #{tpu_custom_call.1} parent=1 // pred_check_branch
      %29 = sbr.rel (0) target = $region21
    $region20: #{tpu_custom_call.1} parent=1 // pred_region
      _
    $region21: #{tpu_custom_call.1} parent=1 // pred_fallthru
      _
    // Predicated region
    $region22: #{tpu_custom_call.1} parent=1 // pred_check
      _
    $region23: #{tpu_custom_call.1} parent=1 // pred_check_branch
      %31 = sbr.rel (0) target = $region25
    $region24: #{tpu_custom_call.1} parent=1 // pred_region
      _
    $region25: #{tpu_custom_call.1} parent=1 // pred_fallthru
      _
    // Predicated region
    $region26: #{tpu_custom_call.1} parent=1 // pred_check
      _
    $region27: #{tpu_custom_call.1} parent=1 // pred_check_branch
      %33 = sbr.rel (0) target = $region29
    $region28: #{tpu_custom_call.1} parent=1 // pred_region
      _
    $region29: #{tpu_custom_call.1} parent=1 // pred_fallthru
      _
    // Predicated region
    $region30: #{tpu_custom_call.1} parent=1 // pred_check
      _
    $region31: #{tpu_custom_call.1} parent=1 // pred_check_branch
      %35 = sbr.rel (0) target = $region33
    $region32: #{tpu_custom_call.1} parent=1 // pred_region
      _
    $region33: #{tpu_custom_call.1} parent=1 // pred_fallthru
      _
    // Predicated region
    $region34: #{tpu_custom_call.1} parent=1 // pred_check
      _
    $region35: #{tpu_custom_call.1} parent=1 // pred_check_branch
      %37 = sbr.rel (0) target = $region37
    $region36: #{tpu_custom_call.1} parent=1 // pred_region
      _
    $region37: #{tpu_custom_call.1} parent=1 // pred_fallthru
      _
    // Predicated region
    $region38: #{tpu_custom_call.1} parent=1 // pred_check
      _
    $region39: #{tpu_custom_call.1} parent=1 // pred_check_branch
      %39 = sbr.rel (0) target = $region41
    $region40: #{tpu_custom_call.1} parent=1 // pred_region
      _
    $region41: #{tpu_custom_call.1} parent=1 // pred_fallthru
      _
    // Predicated region
    $region42: #{tpu_custom_call.1} parent=1 // pred_check
      _
    $region43: #{tpu_custom_call.1} parent=1 // pred_check_branch
      %41 = sbr.rel (0) target = $region45
    $region44: #{tpu_custom_call.1} parent=1 // pred_region
      _
    $region45: #{tpu_custom_call.1} parent=1 // pred_fallthru
      _
    // Predicated region
    $region46: #{tpu_custom_call.1} parent=1 // pred_check
      _
    $region47: #{tpu_custom_call.1} parent=1 // pred_check_branch
      %43 = sbr.rel (0) target = $region49
    $region48: #{tpu_custom_call.1} parent=1 // pred_region
      _
    $region49: #{tpu_custom_call.1} parent=1 // pred_fallthru
      _
    // Predicated region
    $region50: #{tpu_custom_call.1} parent=1 // pred_check
      _
    $region51: #{tpu_custom_call.1} parent=1 // pred_check_branch
      %45 = sbr.rel (0) target = $region53
    $region52: #{tpu_custom_call.1} parent=1 // pred_region
      _
    $region53: #{tpu_custom_call.1} parent=1 // pred_fallthru
      _
    // Predicated region
    $region54: #{tpu_custom_call.1} parent=1 // pred_check
      _
    $region55: #{tpu_custom_call.1} parent=1 // pred_check_branch
      %47 = sbr.rel (0) target = $region57
    $region56: #{tpu_custom_call.1} parent=1 // pred_region
      _
    $region57: #{tpu_custom_call.1} parent=1 // pred_fallthru
      _
    %v49 = vld [vmem:[%s0] sm:$0x3]
    %v50 = vld [vmem:[%s0 + $0x2] sm:$0x3]
    %v51 = vld [vmem:[%s0 + $0x4] sm:$0x3]
    %v52 = vld [vmem:[%s0 + $0x6] sm:$0x3]
    %v53 = vld [vmem:[%s0 + $0x8] sm:$0x3]
    %v54 = vld [vmem:[%s0 + $0xa] sm:$0x3]
    %v55 = vld [vmem:[%s0 + $0xc] sm:$0x3]
    %v56 = vld [vmem:[%s0 + $0xe] sm:$0x3]
    %v57 = vld [vmem:[%s1] sm:$0x3]
    %v58 = vld [vmem:[%s1 + $0x2] sm:$0x3]
    %v59 = vld [vmem:[%s1 + $0x4] sm:$0x3]
    %v60 = vld [vmem:[%s1 + $0x6] sm:$0x3]
    %v61 = vld [vmem:[%s1 + $0x8] sm:$0x3]
    %v62 = vld [vmem:[%s1 + $0xa] sm:$0x3]
    %v63 = vld [vmem:[%s1 + $0xc] sm:$0x3]
    %v64 = vld [vmem:[%s1 + $0xe] sm:$0x3]
    %v65 = vadd.f32 %v49, %v57
    %v66 = vadd.f32 %v50, %v58
    %v67 = vadd.f32 %v51, %v59
    %v68 = vadd.f32 %v52, %v60
    %v69 = vadd.f32 %v53, %v61
    %v70 = vadd.f32 %v54, %v62
    %v71 = vadd.f32 %v55, %v63
    %v72 = vadd.f32 %v56, %v64
    %v81 = vrot.slane %v50, 7
    %vm82 = vcmask 1041409
    %v83 = vsel %vm82, %v81, %v49
    %v84 = vrot.slane %v51, 6
    %vm85 = vcmask 1042434
    %v86 = vsel %vm85, %v84, %v83
    %v87 = vrot.slane %v52, 5
    %vm88 = vcmask 1043459
    %v89 = vsel %vm88, %v87, %v86
    %v90 = vrot.slane %v53, 4
    %vm91 = vcmask 1044484
    %v92 = vsel %vm91, %v90, %v89
    %v93 = vrot.slane %v54, 3
    %vm94 = vcmask 1045509
    %v95 = vsel %vm94, %v93, %v92
    %v96 = vrot.slane %v55, 2
    %vm97 = vcmask 1046534
    %v98 = vsel %vm97, %v96, %v95
    %v99 = vrot.slane %v56, 1
    %vm100 = vcmask 1047559
    %v101 = vsel %vm100, %v99, %v98
    %v103 = vrot.slane %v49, 1
    %v104 = vsel %vm82, %v50, %v103
    %v105 = vrot.slane %v51, 7
    %v106 = vsel %vm85, %v105, %v104
    %v107 = vrot.slane %v52, 6
    %v108 = vsel %vm88, %v107, %v106
    %v109 = vrot.slane %v53, 5
    %v110 = vsel %vm91, %v109, %v108
    %v111 = vrot.slane %v54, 4
    %v112 = vsel %vm94, %v111, %v110
    %v113 = vrot.slane %v55, 3
    %v114 = vsel %vm97, %v113, %v112
    %v115 = vrot.slane %v56, 2
    %v116 = vsel %vm100, %v115, %v114
    %v126 = vrot.slane %v66, 7
    %v127 = vsel %vm82, %v126, %v65
    %v128 = vrot.slane %v67, 6
    %v129 = vsel %vm85, %v128, %v127
    %v130 = vrot.slane %v68, 5
    %v131 = vsel %vm88, %v130, %v129
    %v132 = vrot.slane %v69, 4
    %v133 = vsel %vm91, %v132, %v131
    %v134 = vrot.slane %v70, 3
    %v135 = vsel %vm94, %v134, %v133
    %v136 = vrot.slane %v71, 2
    %v137 = vsel %vm97, %v136, %v135
    %v138 = vrot.slane %v72, 1
    %v139 = vsel %vm100, %v138, %v137
    %v141 = vrot.slane %v65, 1
    %v142 = vsel %vm82, %v66, %v141
    %v143 = vrot.slane %v67, 7
    %v144 = vsel %vm85, %v143, %v142
    %v145 = vrot.slane %v68, 6
    %v146 = vsel %vm88, %v145, %v144
    %v147 = vrot.slane %v69, 5
    %v148 = vsel %vm91, %v147, %v146
    %v149 = vrot.slane %v70, 4
    %v150 = vsel %vm94, %v149, %v148
    %v151 = vrot.slane %v71, 3
    %v152 = vsel %vm97, %v151, %v150
    %v153 = vrot.slane %v72, 2
    %v154 = vsel %vm100, %v153, %v152
    %v156 = vpack.c.bf16 %v154, %v139
    %v157 = vpack.c.bf16 %v116, %v101
    %v158 = vld [vmem:[%s2] sm:$0xf]
    %v159 = vld [vmem:[%s2 + $0x4] sm:$0xf]
    %v160 = vld [vmem:[%s2 + $0x8] sm:$0xf]
    %v161 = vld [vmem:[%s2 + $0xc] sm:$0xf]
    %v162 = vld [vmem:[%s3] sm:$0x1]
    %v164 = vlaneseq
    %v165 = vshrl.u32 %v164, 7
    %v166 = vsub.s32 0, %v165
    %v167 = vrot.slane %v162, %v166
    %v173 = vunpack.c.l.b16 %v158
    %v174 = vunpack.c.l.b16 %v159
    %v175 = vunpack.c.l.b16 %v160
    %v176 = vunpack.c.l.b16 %v161
    %v177 = vpack.c.b16 %v174, %v173
    %v178 = vpack.c.b16 %v176, %v175
    %vm181 = vcmask 261120
    %v183 = vsel %vm181, %v156, 0
    %185 = vmatprep.subr.bf16.mxu0 0
    %186 = vmatpush1.bf16.msra.mxu0 0
    %187 = vmatprep.subr.bf16.mxu0 0
    %188 = vmatpush1.bf16.msra.mxu0 0
    %189 = vmatprep.subr.bf16.mxu0 0
    %190 = vmatpush1.bf16.msra.mxu0 0
    %191 = vmatprep.subr.bf16.mxu0 0
    %192 = vmatpush1.bf16.msra.mxu0 0
    %193 = vmatprep.subr.bf16.mxu0 0
    %194 = vmatpush1.bf16.msra.mxu0 0
    %195 = vmatprep.subr.bf16.mxu0 0
    %196 = vmatpush1.bf16.msra.mxu0 0
    %197 = vmatprep.subr.bf16.mxu0 0
    %198 = vmatpush1.bf16.msra.mxu0 %v178
    %199 = vmatprep.subr.bf16.mxu0 0
    %200 = vmatpush1.bf16.msra.mxu0 %v177
    %201 = vmatprep.subr.bf16.mxu0 0
    %202 = vmatpush2.bf16.msra.mxu0 0
    %203 = vmatprep.subr.bf16.mxu0 0
    %204 = vmatpush2.bf16.msra.mxu0 0
    %205 = vmatprep.subr.bf16.mxu0 0
    %206 = vmatpush2.bf16.msra.mxu0 0
    %207 = vmatprep.subr.bf16.mxu0 0
    %208 = vmatpush2.bf16.msra.mxu0 0
    %209 = vmatprep.subr.bf16.mxu0 0
    %210 = vmatpush2.bf16.msra.mxu0 0
    %211 = vmatprep.subr.bf16.mxu0 0
    %212 = vmatpush2.bf16.msra.mxu0 0
    %213 = vmatprep.subr.bf16.mxu0 0
    %214 = vmatpush2.bf16.msra.mxu0 0
    %215 = vmatprep.subr.bf16.mxu0 0
    %216 = vmatpush2.bf16.msra.mxu0 0
    %217 = vmatprep.mubr.bf16.mxu0 0
    %218 = vmatmul.mubr.bf16.gmra.mxu0 %v183
    %v219 = vpop.f32.mrf.mxu0
    %v220 = vadd.f32 %v167, %v219
    %v221 = vpop.f32.mrf.mxu0
    %v222 = vpop.f32.mrf.mxu0
    %v223 = vadd.f32 %v167, %v222
    %v224 = vpop.f32.mrf.mxu0
    %225 = vdwg.mxu0
    %v226 = vpack.c.bf16 %v223, %v220
    %v228 = vunpack.c.l.b16 %v226
    %v229 = vunpack.c.h.b16 %v226
    %v230 = vpack.c.b16 %v228, %v228
    %v231 = vpack.c.b16 %v229, %v229
    %v232 = vld [vmem:[%s4] sm:$0xf]
    %v233 = vld [vmem:[%s4 + $0x4] sm:$0xf]
    %v234 = vld [vmem:[%s4 + $0x8] sm:$0xf]
    %v235 = vld [vmem:[%s4 + $0xc] sm:$0xf]
    %v236 = vld [vmem:[%s5] sm:$0x1]
    %v238 = vlaneseq
    %v239 = vshrl.u32 %v238, 7
    %v240 = vsub.s32 0, %v239
    %v241 = vrot.slane %v236, %v240
    %v247 = vunpack.c.l.b16 %v232
    %v248 = vunpack.c.l.b16 %v233
    %v249 = vunpack.c.l.b16 %v234
    %v250 = vunpack.c.l.b16 %v235
    %v251 = vpack.c.b16 %v248, %v247
    %v252 = vpack.c.b16 %v250, %v249
    %255 = vmatprep.subr.bf16.mxu0 0
    %256 = vmatpush1.bf16.msra.mxu0 0
    %257 = vmatprep.subr.bf16.mxu0 0
    %258 = vmatpush1.bf16.msra.mxu0 0
    %259 = vmatprep.subr.bf16.mxu0 0
    %260 = vmatpush1.bf16.msra.mxu0 0
    %261 = vmatprep.subr.bf16.mxu0 0
    %262 = vmatpush1.bf16.msra.mxu0 0
    %263 = vmatprep.subr.bf16.mxu0 0
    %264 = vmatpush1.bf16.msra.mxu0 0
    %265 = vmatprep.subr.bf16.mxu0 0
    %266 = vmatpush1.bf16.msra.mxu0 0
    %267 = vmatprep.subr.bf16.mxu0 0
    %268 = vmatpush1.bf16.msra.mxu0 %v252
    %269 = vmatprep.subr.bf16.mxu0 0
    %270 = vmatpush1.bf16.msra.mxu0 %v251
    %271 = vmatprep.subr.bf16.mxu0 0
    %272 = vmatpush2.bf16.msra.mxu0 0
    %273 = vmatprep.subr.bf16.mxu0 0
    %274 = vmatpush2.bf16.msra.mxu0 0
    %275 = vmatprep.subr.bf16.mxu0 0
    %276 = vmatpush2.bf16.msra.mxu0 0
    %277 = vmatprep.subr.bf16.mxu0 0
    %278 = vmatpush2.bf16.msra.mxu0 0
    %279 = vmatprep.subr.bf16.mxu0 0
    %280 = vmatpush2.bf16.msra.mxu0 0
    %281 = vmatprep.subr.bf16.mxu0 0
    %282 = vmatpush2.bf16.msra.mxu0 0
    %283 = vmatprep.subr.bf16.mxu0 0
    %284 = vmatpush2.bf16.msra.mxu0 0
    %285 = vmatprep.subr.bf16.mxu0 0
    %286 = vmatpush2.bf16.msra.mxu0 0
    %287 = vmatprep.mubr.bf16.mxu0 0
    %288 = vmatmul.mubr.bf16.gmra.mxu0 %v183
    %v289 = vpop.f32.mrf.mxu0
    %v290 = vadd.f32 %v241, %v289
    %v291 = vpop.f32.mrf.mxu0
    %v292 = vpop.f32.mrf.mxu0
    %v293 = vadd.f32 %v241, %v292
    %v294 = vpop.f32.mrf.mxu0
    %295 = vdwg.mxu0
    %v296 = vpack.c.bf16 %v293, %v290
    %v298 = vunpack.c.l.b16 %v296
    %v299 = vunpack.c.h.b16 %v296
    %v300 = vpack.c.b16 %v298, %v298
    %v301 = vpack.c.b16 %v299, %v299
    %v302 = vld [vmem:[%s6] sm:$0xf]
    %v303 = vld [vmem:[%s6 + $0x4] sm:$0xf]
    %v304 = vld [vmem:[%s6 + $0x8] sm:$0xf]
    %v305 = vld [vmem:[%s6 + $0xc] sm:$0xf]
    %v306 = vld [vmem:[%s7] sm:$0x1]
    %v308 = vlaneseq
    %v309 = vshrl.u32 %v308, 7
    %v310 = vsub.s32 0, %v309
    %v311 = vrot.slane %v306, %v310
    %v317 = vunpack.c.l.b16 %v302
    %v318 = vunpack.c.l.b16 %v303
    %v319 = vunpack.c.l.b16 %v304
    %v320 = vunpack.c.l.b16 %v305
    %v321 = vpack.c.b16 %v318, %v317
    %v322 = vpack.c.b16 %v320, %v319
    %v326 = vsel %vm181, %v157, 0
    %328 = vmatprep.subr.bf16.mxu0 0
    %329 = vmatpush1.bf16.msra.mxu0 0
    %330 = vmatprep.subr.bf16.mxu0 0
    %331 = vmatpush1.bf16.msra.mxu0 0
    %332 = vmatprep.subr.bf16.mxu0 0
    %333 = vmatpush1.bf16.msra.mxu0 0
    %334 = vmatprep.subr.bf16.mxu0 0
    %335 = vmatpush1.bf16.msra.mxu0 0
    %336 = vmatprep.subr.bf16.mxu0 0
    %337 = vmatpush1.bf16.msra.mxu0 0
    %338 = vmatprep.subr.bf16.mxu0 0
    %339 = vmatpush1.bf16.msra.mxu0 0
    %340 = vmatprep.subr.bf16.mxu0 0
    %341 = vmatpush1.bf16.msra.mxu0 %v322
    %342 = vmatprep.subr.bf16.mxu0 0
    %343 = vmatpush1.bf16.msra.mxu0 %v321
    %344 = vmatprep.subr.bf16.mxu0 0
    %345 = vmatpush2.bf16.msra.mxu0 0
    %346 = vmatprep.subr.bf16.mxu0 0
    %347 = vmatpush2.bf16.msra.mxu0 0
    %348 = vmatprep.subr.bf16.mxu0 0
    %349 = vmatpush2.bf16.msra.mxu0 0
    %350 = vmatprep.subr.bf16.mxu0 0
    %351 = vmatpush2.bf16.msra.mxu0 0
    %352 = vmatprep.subr.bf16.mxu0 0
    %353 = vmatpush2.bf16.msra.mxu0 0
    %354 = vmatprep.subr.bf16.mxu0 0
    %355 = vmatpush2.bf16.msra.mxu0 0
    %356 = vmatprep.subr.bf16.mxu0 0
    %357 = vmatpush2.bf16.msra.mxu0 0
    %358 = vmatprep.subr.bf16.mxu0 0
    %359 = vmatpush2.bf16.msra.mxu0 0
    %360 = vmatprep.mubr.bf16.mxu0 0
    %361 = vmatmul.mubr.bf16.gmra.mxu0 %v326
    %v362 = vpop.f32.mrf.mxu0
    %v363 = vadd.f32 %v311, %v362
    %v364 = vpop.f32.mrf.mxu0
    %v365 = vpop.f32.mrf.mxu0
    %v366 = vadd.f32 %v311, %v365
    %v367 = vpop.f32.mrf.mxu0
    %368 = vdwg.mxu0
    %v369 = vpack.c.bf16 %v366, %v363
    %v371 = vunpack.c.l.b16 %v369
    %v372 = vunpack.c.h.b16 %v369
    %v373 = vpack.c.b16 %v371, %v371
    %v374 = vpack.c.b16 %v372, %v372
    %vm375 = vcmask 64512
    %v377 = vsel %vm375, %v230, 0
    %v380 = vsel %vm375, %v300, 0
    %382 = vmatprep.subr.bf16.mxu0 0
    %383 = vmatpush1.bf16.xpose.msra.mxu0 0
    %384 = vmatprep.subr.bf16.mxu0 0
    %385 = vmatpush1.bf16.xpose.msra.mxu0 0
    %386 = vmatprep.subr.bf16.mxu0 0
    %387 = vmatpush1.bf16.xpose.msra.mxu0 0
    %388 = vmatprep.subr.bf16.mxu0 0
    %389 = vmatpush1.bf16.xpose.msra.mxu0 0
    %390 = vmatprep.subr.bf16.mxu0 0
    %391 = vmatpush1.bf16.xpose.msra.mxu0 0
    %392 = vmatprep.subr.bf16.mxu0 0
    %393 = vmatpush1.bf16.xpose.msra.mxu0 0
    %394 = vmatprep.subr.bf16.mxu0 0
    %395 = vmatpush1.bf16.xpose.msra.mxu0 0
    %396 = vmatprep.subr.bf16.mxu0 0
    %397 = vmatpush1.bf16.xpose.msra.mxu0 %v380
    %398 = vmatprep.subr.bf16.mxu0 0
    %399 = vmatpush2.bf16.xpose.msra.mxu0 0
    %400 = vmatprep.subr.bf16.mxu0 0
    %401 = vmatpush2.bf16.xpose.msra.mxu0 0
    %402 = vmatprep.subr.bf16.mxu0 0
    %403 = vmatpush2.bf16.xpose.msra.mxu0 0
    %404 = vmatprep.subr.bf16.mxu0 0
    %405 = vmatpush2.bf16.xpose.msra.mxu0 0
    %406 = vmatprep.subr.bf16.mxu0 0
    %407 = vmatpush2.bf16.xpose.msra.mxu0 0
    %408 = vmatprep.subr.bf16.mxu0 0
    %409 = vmatpush2.bf16.xpose.msra.mxu0 0
    %410 = vmatprep.subr.bf16.mxu0 0
    %411 = vmatpush2.bf16.xpose.msra.mxu0 0
    %412 = vmatprep.subr.bf16.mxu0 0
    %413 = vmatpush2.bf16.xpose.msra.mxu0 0
    %414 = vmatprep.mubr.bf16.mxu0 0
    %415 = vmatmul.mubr.bf16.gmra.mxu0 %v377
    %v416 = vpop.f32.mrf.mxu0
    %v417 = vadd.f32 0.0, %v416
    %v418 = vpop.f32.mrf.mxu0
    %v419 = vpop.f32.mrf.mxu0
    %v420 = vpop.f32.mrf.mxu0
    %421 = vdwg.mxu0
    %v423 = vsel %vm375, %v231, 0
    %v426 = vsel %vm375, %v301, 0
    %428 = vmatprep.subr.bf16.mxu0 0
    %429 = vmatpush1.bf16.xpose.msra.mxu0 0
    %430 = vmatprep.subr.bf16.mxu0 0
    %431 = vmatpush1.bf16.xpose.msra.mxu0 0
    %432 = vmatprep.subr.bf16.mxu0 0
    %433 = vmatpush1.bf16.xpose.msra.mxu0 0
    %434 = vmatprep.subr.bf16.mxu0 0
    %435 = vmatpush1.bf16.xpose.msra.mxu0 0
    %436 = vmatprep.subr.bf16.mxu0 0
    %437 = vmatpush1.bf16.xpose.msra.mxu0 0
    %438 = vmatprep.subr.bf16.mxu0 0
    %439 = vmatpush1.bf16.xpose.msra.mxu0 0
    %440 = vmatprep.subr.bf16.mxu0 0
    %441 = vmatpush1.bf16.xpose.msra.mxu0 0
    %442 = vmatprep.subr.bf16.mxu0 0
    %443 = vmatpush1.bf16.xpose.msra.mxu0 %v426
    %444 = vmatprep.subr.bf16.mxu0 0
    %445 = vmatpush2.bf16.xpose.msra.mxu0 0
    %446 = vmatprep.subr.bf16.mxu0 0
    %447 = vmatpush2.bf16.xpose.msra.mxu0 0
    %448 = vmatprep.subr.bf16.mxu0 0
    %449 = vmatpush2.bf16.xpose.msra.mxu0 0
    %450 = vmatprep.subr.bf16.mxu0 0
    %451 = vmatpush2.bf16.xpose.msra.mxu0 0
    %452 = vmatprep.subr.bf16.mxu0 0
    %453 = vmatpush2.bf16.xpose.msra.mxu0 0
    %454 = vmatprep.subr.bf16.mxu0 0
    %455 = vmatpush2.bf16.xpose.msra.mxu0 0
    %456 = vmatprep.subr.bf16.mxu0 0
    %457 = vmatpush2.bf16.xpose.msra.mxu0 0
    %458 = vmatprep.subr.bf16.mxu0 0
    %459 = vmatpush2.bf16.xpose.msra.mxu0 0
    %460 = vmatprep.mubr.bf16.mxu0 0
    %461 = vmatmul.mubr.bf16.gmra.mxu0 %v423
    %v462 = vpop.f32.mrf.mxu0
    %v463 = vadd.f32 0.0, %v462
    %v464 = vpop.f32.mrf.mxu0
    %v465 = vpop.f32.mrf.mxu0
    %v466 = vpop.f32.mrf.mxu0
    %467 = vdwg.mxu0
    %v468 = vsel %vm375, %v417, -inf
    %469 = vmax.xlane.f32.xlu0 %v468
    %v470 = vpop.xlane.xlu0 %469
    %v471 = vsel %vm375, %v463, -inf
    %472 = vmax.xlane.f32.xlu0 %v471
    %v473 = vpop.xlane.xlu0 %472
    %v474 = vsub.f32 %v417, %v470
    %v475 = vsub.f32 %v463, %v473
    %v476 = vmul.f32 %v474, 1.442695
    %v477 = vpow.pop %v476
    %v478 = vmul.f32 %v475, 1.442695
    %v479 = vpow.pop %v478
    %v480 = vsel %vm375, %v477, 0.0
    %481 = vadd.xlane.f32.xlu0 %v480
    %v482 = vpop.xlane.xlu0 %481
    %v483 = vsel %vm375, %v479, 0.0
    %484 = vadd.xlane.f32.xlu0 %v483
    %v485 = vpop.xlane.xlu0 %484
    %v486 = vrcp.pop %v482
    %v487 = vrcp.pop %v485
    %v488 = vmul.f32 %v477, %v486
    %v489 = vmul.f32 %v479, %v487
    %v490 = vpack.c.bf16 %v488, %v488
    %v491 = vpack.c.bf16 %v489, %v489
    %v493 = vsel %vm375, %v490, 0
    %vm495 = vcmask 1043456
    %v497 = vsel %vm495, %v373, 0
    %499 = vmatprep.subr.bf16.mxu0 0
    %500 = vmatpush1.bf16.msra.mxu0 0
    %501 = vmatprep.subr.bf16.mxu0 0
    %502 = vmatpush1.bf16.msra.mxu0 0
    %503 = vmatprep.subr.bf16.mxu0 0
    %504 = vmatpush1.bf16.msra.mxu0 0
    %505 = vmatprep.subr.bf16.mxu0 0
    %506 = vmatpush1.bf16.msra.mxu0 0
    %507 = vmatprep.subr.bf16.mxu0 0
    %508 = vmatpush1.bf16.msra.mxu0 0
    %509 = vmatprep.subr.bf16.mxu0 0
    %510 = vmatpush1.bf16.msra.mxu0 0
    %511 = vmatprep.subr.bf16.mxu0 0
    %512 = vmatpush1.bf16.msra.mxu0 0
    %513 = vmatprep.subr.bf16.mxu0 0
    %514 = vmatpush1.bf16.msra.mxu0 %v497
    %515 = vmatprep.subr.bf16.mxu0 0
    %516 = vmatpush2.bf16.msra.mxu0 0
    %517 = vmatprep.subr.bf16.mxu0 0
    %518 = vmatpush2.bf16.msra.mxu0 0
    %519 = vmatprep.subr.bf16.mxu0 0
    %520 = vmatpush2.bf16.msra.mxu0 0
    %521 = vmatprep.subr.bf16.mxu0 0
    %522 = vmatpush2.bf16.msra.mxu0 0
    %523 = vmatprep.subr.bf16.mxu0 0
    %524 = vmatpush2.bf16.msra.mxu0 0
    %525 = vmatprep.subr.bf16.mxu0 0
    %526 = vmatpush2.bf16.msra.mxu0 0
    %527 = vmatprep.subr.bf16.mxu0 0
    %528 = vmatpush2.bf16.msra.mxu0 0
    %529 = vmatprep.subr.bf16.mxu0 0
    %530 = vmatpush2.bf16.msra.mxu0 0
    %531 = vmatprep.mubr.bf16.mxu0 0
    %532 = vmatmul.mubr.bf16.gmra.mxu0 %v493
    %v533 = vpop.f32.mrf.mxu0
    %v534 = vadd.f32 0.0, %v533
    %v535 = vpop.f32.mrf.mxu0
    %v536 = vpop.f32.mrf.mxu0
    %v537 = vpop.f32.mrf.mxu0
    %538 = vdwg.mxu0
    %v540 = vsel %vm375, %v491, 0
    %v543 = vsel %vm495, %v374, 0
    %545 = vmatprep.subr.bf16.mxu0 0
    %546 = vmatpush1.bf16.msra.mxu0 0
    %547 = vmatprep.subr.bf16.mxu0 0
    %548 = vmatpush1.bf16.msra.mxu0 0
    %549 = vmatprep.subr.bf16.mxu0 0
    %550 = vmatpush1.bf16.msra.mxu0 0
    %551 = vmatprep.subr.bf16.mxu0 0
    %552 = vmatpush1.bf16.msra.mxu0 0
    %553 = vmatprep.subr.bf16.mxu0 0
    %554 = vmatpush1.bf16.msra.mxu0 0
    %555 = vmatprep.subr.bf16.mxu0 0
    %556 = vmatpush1.bf16.msra.mxu0 0
    %557 = vmatprep.subr.bf16.mxu0 0
    %558 = vmatpush1.bf16.msra.mxu0 0
    %559 = vmatprep.subr.bf16.mxu0 0
    %560 = vmatpush1.bf16.msra.mxu0 %v543
    %561 = vmatprep.subr.bf16.mxu0 0
    %562 = vmatpush2.bf16.msra.mxu0 0
    %563 = vmatprep.subr.bf16.mxu0 0
    %564 = vmatpush2.bf16.msra.mxu0 0
    %565 = vmatprep.subr.bf16.mxu0 0
    %566 = vmatpush2.bf16.msra.mxu0 0
    %567 = vmatprep.subr.bf16.mxu0 0
    %568 = vmatpush2.bf16.msra.mxu0 0
    %569 = vmatprep.subr.bf16.mxu0 0
    %570 = vmatpush2.bf16.msra.mxu0 0
    %571 = vmatprep.subr.bf16.mxu0 0
    %572 = vmatpush2.bf16.msra.mxu0 0
    %573 = vmatprep.subr.bf16.mxu0 0
    %574 = vmatpush2.bf16.msra.mxu0 0
    %575 = vmatprep.subr.bf16.mxu0 0
    %576 = vmatpush2.bf16.msra.mxu0 0
    %577 = vmatprep.mubr.bf16.mxu0 0
    %578 = vmatmul.mubr.bf16.gmra.mxu0 %v540
    %v579 = vpop.f32.mrf.mxu0
    %v580 = vadd.f32 0.0, %v579
    %v581 = vpop.f32.mrf.mxu0
    %v582 = vpop.f32.mrf.mxu0
    %v583 = vpop.f32.mrf.mxu0
    %584 = vdwg.mxu0
    %v585 = vpack.c.bf16 %v534, %v534
    %v586 = vpack.c.bf16 %v580, %v580
    %v587 = vld [vmem:[%s8] sm:$0xf]
    %s588 = scalar_lea.vmem %s2, 16
    %v589 = vld [vmem:[%s588] sm:$0xf]
    %v590 = vld [vmem:[%s588 + $0x4] sm:$0xf]
    %v591 = vld [vmem:[%s588 + $0x8] sm:$0xf]
    %v592 = vld [vmem:[%s588 + $0xc] sm:$0xf]
    %s593 = scalar_lea.vmem %s3, 1
    %v594 = vld [vmem:[%s593] sm:$0x1]
    %v596 = vlaneseq
    %v597 = vshrl.u32 %v596, 7
    %v598 = vsub.s32 0, %v597
    %v599 = vrot.slane %v594, %v598
    %v605 = vunpack.c.l.b16 %v589
    %v606 = vunpack.c.l.b16 %v590
    %v607 = vunpack.c.l.b16 %v591
    %v608 = vunpack.c.l.b16 %v592
    %v609 = vpack.c.b16 %v606, %v605
    %v610 = vpack.c.b16 %v608, %v607
    %613 = vmatprep.subr.bf16.mxu0 0
    %614 = vmatpush1.bf16.msra.mxu0 0
    %615 = vmatprep.subr.bf16.mxu0 0
    %616 = vmatpush1.bf16.msra.mxu0 0
    %617 = vmatprep.subr.bf16.mxu0 0
    %618 = vmatpush1.bf16.msra.mxu0 0
    %619 = vmatprep.subr.bf16.mxu0 0
    %620 = vmatpush1.bf16.msra.mxu0 0
    %621 = vmatprep.subr.bf16.mxu0 0
    %622 = vmatpush1.bf16.msra.mxu0 0
    %623 = vmatprep.subr.bf16.mxu0 0
    %624 = vmatpush1.bf16.msra.mxu0 0
    %625 = vmatprep.subr.bf16.mxu0 0
    %626 = vmatpush1.bf16.msra.mxu0 %v610
    %627 = vmatprep.subr.bf16.mxu0 0
    %628 = vmatpush1.bf16.msra.mxu0 %v609
    %629 = vmatprep.subr.bf16.mxu0 0
    %630 = vmatpush2.bf16.msra.mxu0 0
    %631 = vmatprep.subr.bf16.mxu0 0
    %632 = vmatpush2.bf16.msra.mxu0 0
    %633 = vmatprep.subr.bf16.mxu0 0
    %634 = vmatpush2.bf16.msra.mxu0 0
    %635 = vmatprep.subr.bf16.mxu0 0
    %636 = vmatpush2.bf16.msra.mxu0 0
    %637 = vmatprep.subr.bf16.mxu0 0
    %638 = vmatpush2.bf16.msra.mxu0 0
    %639 = vmatprep.subr.bf16.mxu0 0
    %640 = vmatpush2.bf16.msra.mxu0 0
    %641 = vmatprep.subr.bf16.mxu0 0
    %642 = vmatpush2.bf16.msra.mxu0 0
    %643 = vmatprep.subr.bf16.mxu0 0
    %644 = vmatpush2.bf16.msra.mxu0 0
    %645 = vmatprep.mubr.bf16.mxu0 0
    %646 = vmatmul.mubr.bf16.gmra.mxu0 %v183
    %v647 = vpop.f32.mrf.mxu0
    %v648 = vadd.f32 %v599, %v647
    %v649 = vpop.f32.mrf.mxu0
    %v650 = vpop.f32.mrf.mxu0
    %v651 = vadd.f32 %v599, %v650
    %v652 = vpop.f32.mrf.mxu0
    %653 = vdwg.mxu0
    %v654 = vpack.c.bf16 %v651, %v648
    %v656 = vunpack.c.l.b16 %v654
    %v657 = vunpack.c.h.b16 %v654
    %v658 = vpack.c.b16 %v656, %v656
    %v659 = vpack.c.b16 %v657, %v657
    %s660 = scalar_lea.vmem %s4, 16
    %v661 = vld [vmem:[%s660] sm:$0xf]
    %v662 = vld [vmem:[%s660 + $0x4] sm:$0xf]
    %v663 = vld [vmem:[%s660 + $0x8] sm:$0xf]
    %v664 = vld [vmem:[%s660 + $0xc] sm:$0xf]
    %s665 = scalar_lea.vmem %s5, 1
    %v666 = vld [vmem:[%s665] sm:$0x1]
    %v668 = vlaneseq
    %v669 = vshrl.u32 %v668, 7
    %v670 = vsub.s32 0, %v669
    %v671 = vrot.slane %v666, %v670
    %v677 = vunpack.c.l.b16 %v661
    %v678 = vunpack.c.l.b16 %v662
    %v679 = vunpack.c.l.b16 %v663
    %v680 = vunpack.c.l.b16 %v664
    %v681 = vpack.c.b16 %v678, %v677
    %v682 = vpack.c.b16 %v680, %v679
    %685 = vmatprep.subr.bf16.mxu0 0
    %686 = vmatpush1.bf16.msra.mxu0 0
    %687 = vmatprep.subr.bf16.mxu0 0
    %688 = vmatpush1.bf16.msra.mxu0 0
    %689 = vmatprep.subr.bf16.mxu0 0
    %690 = vmatpush1.bf16.msra.mxu0 0
    %691 = vmatprep.subr.bf16.mxu0 0
    %692 = vmatpush1.bf16.msra.mxu0 0
    %693 = vmatprep.subr.bf16.mxu0 0
    %694 = vmatpush1.bf16.msra.mxu0 0
    %695 = vmatprep.subr.bf16.mxu0 0
    %696 = vmatpush1.bf16.msra.mxu0 0
    %697 = vmatprep.subr.bf16.mxu0 0
    %698 = vmatpush1.bf16.msra.mxu0 %v682
    %699 = vmatprep.subr.bf16.mxu0 0
    %700 = vmatpush1.bf16.msra.mxu0 %v681
    %701 = vmatprep.subr.bf16.mxu0 0
    %702 = vmatpush2.bf16.msra.mxu0 0
    %703 = vmatprep.subr.bf16.mxu0 0
    %704 = vmatpush2.bf16.msra.mxu0 0
    %705 = vmatprep.subr.bf16.mxu0 0
    %706 = vmatpush2.bf16.msra.mxu0 0
    %707 = vmatprep.subr.bf16.mxu0 0
    %708 = vmatpush2.bf16.msra.mxu0 0
    %709 = vmatprep.subr.bf16.mxu0 0
    %710 = vmatpush2.bf16.msra.mxu0 0
    %711 = vmatprep.subr.bf16.mxu0 0
    %712 = vmatpush2.bf16.msra.mxu0 0
    %713 = vmatprep.subr.bf16.mxu0 0
    %714 = vmatpush2.bf16.msra.mxu0 0
    %715 = vmatprep.subr.bf16.mxu0 0
    %716 = vmatpush2.bf16.msra.mxu0 0
    %717 = vmatprep.mubr.bf16.mxu0 0
    %718 = vmatmul.mubr.bf16.gmra.mxu0 %v183
    %v719 = vpop.f32.mrf.mxu0
    %v720 = vadd.f32 %v671, %v719
    %v721 = vpop.f32.mrf.mxu0
    %v722 = vpop.f32.mrf.mxu0
    %v723 = vadd.f32 %v671, %v722
    %v724 = vpop.f32.mrf.mxu0
    %725 = vdwg.mxu0
    %v726 = vpack.c.bf16 %v723, %v720
    %v728 = vunpack.c.l.b16 %v726
    %v729 = vunpack.c.h.b16 %v726
    %v730 = vpack.c.b16 %v728, %v728
    %v731 = vpack.c.b16 %v729, %v729
    %s732 = scalar_lea.vmem %s6, 16
    %v733 = vld [vmem:[%s732] sm:$0xf]
    %v734 = vld [vmem:[%s732 + $0x4] sm:$0xf]
    %v735 = vld [vmem:[%s732 + $0x8] sm:$0xf]
    %v736 = vld [vmem:[%s732 + $0xc] sm:$0xf]
    %s737 = scalar_lea.vmem %s7, 1
    %v738 = vld [vmem:[%s737] sm:$0x1]
    %v740 = vlaneseq
    %v741 = vshrl.u32 %v740, 7
    %v742 = vsub.s32 0, %v741
    %v743 = vrot.slane %v738, %v742
    %v749 = vunpack.c.l.b16 %v733
    %v750 = vunpack.c.l.b16 %v734
    %v751 = vunpack.c.l.b16 %v735
    %v752 = vunpack.c.l.b16 %v736
    %v753 = vpack.c.b16 %v750, %v749
    %v754 = vpack.c.b16 %v752, %v751
    %757 = vmatprep.subr.bf16.mxu0 0
    %758 = vmatpush1.bf16.msra.mxu0 0
    %759 = vmatprep.subr.bf16.mxu0 0
    %760 = vmatpush1.bf16.msra.mxu0 0
    %761 = vmatprep.subr.bf16.mxu0 0
    %762 = vmatpush1.bf16.msra.mxu0 0
    %763 = vmatprep.subr.bf16.mxu0 0
    %764 = vmatpush1.bf16.msra.mxu0 0
    %765 = vmatprep.subr.bf16.mxu0 0
    %766 = vmatpush1.bf16.msra.mxu0 0
    %767 = vmatprep.subr.bf16.mxu0 0
    %768 = vmatpush1.bf16.msra.mxu0 0
    %769 = vmatprep.subr.bf16.mxu0 0
    %770 = vmatpush1.bf16.msra.mxu0 %v754
    %771 = vmatprep.subr.bf16.mxu0 0
    %772 = vmatpush1.bf16.msra.mxu0 %v753
    %773 = vmatprep.subr.bf16.mxu0 0
    %774 = vmatpush2.bf16.msra.mxu0 0
    %775 = vmatprep.subr.bf16.mxu0 0
    %776 = vmatpush2.bf16.msra.mxu0 0
    %777 = vmatprep.subr.bf16.mxu0 0
    %778 = vmatpush2.bf16.msra.mxu0 0
    %779 = vmatprep.subr.bf16.mxu0 0
    %780 = vmatpush2.bf16.msra.mxu0 0
    %781 = vmatprep.subr.bf16.mxu0 0
    %782 = vmatpush2.bf16.msra.mxu0 0
    %783 = vmatprep.subr.bf16.mxu0 0
    %784 = vmatpush2.bf16.msra.mxu0 0
    %785 = vmatprep.subr.bf16.mxu0 0
    %786 = vmatpush2.bf16.msra.mxu0 0
    %787 = vmatprep.subr.bf16.mxu0 0
    %788 = vmatpush2.bf16.msra.mxu0 0
    %789 = vmatprep.mubr.bf16.mxu0 0
    %790 = vmatmul.mubr.bf16.gmra.mxu0 %v326
    %v791 = vpop.f32.mrf.mxu0
    %v792 = vadd.f32 %v743, %v791
    %v793 = vpop.f32.mrf.mxu0
    %v794 = vpop.f32.mrf.mxu0
    %v795 = vadd.f32 %v743, %v794
    %v796 = vpop.f32.mrf.mxu0
    %797 = vdwg.mxu0
    %v798 = vpack.c.bf16 %v795, %v792
    %v800 = vunpack.c.l.b16 %v798
    %v801 = vunpack.c.h.b16 %v798
    %v802 = vpack.c.b16 %v800, %v800
    %v803 = vpack.c.b16 %v801, %v801
    %v805 = vsel %vm375, %v658, 0
    %v808 = vsel %vm375, %v730, 0
    %810 = vmatprep.subr.bf16.mxu0 0
    %811 = vmatpush1.bf16.xpose.msra.mxu0 0
    %812 = vmatprep.subr.bf16.mxu0 0
    %813 = vmatpush1.bf16.xpose.msra.mxu0 0
    %814 = vmatprep.subr.bf16.mxu0 0
    %815 = vmatpush1.bf16.xpose.msra.mxu0 0
    %816 = vmatprep.subr.bf16.mxu0 0
    %817 = vmatpush1.bf16.xpose.msra.mxu0 0
    %818 = vmatprep.subr.bf16.mxu0 0
    %819 = vmatpush1.bf16.xpose.msra.mxu0 0
    %820 = vmatprep.subr.bf16.mxu0 0
    %821 = vmatpush1.bf16.xpose.msra.mxu0 0
    %822 = vmatprep.subr.bf16.mxu0 0
    %823 = vmatpush1.bf16.xpose.msra.mxu0 0
    %824 = vmatprep.subr.bf16.mxu0 0
    %825 = vmatpush1.bf16.xpose.msra.mxu0 %v808
    %826 = vmatprep.subr.bf16.mxu0 0
    %827 = vmatpush2.bf16.xpose.msra.mxu0 0
    %828 = vmatprep.subr.bf16.mxu0 0
    %829 = vmatpush2.bf16.xpose.msra.mxu0 0
    %830 = vmatprep.subr.bf16.mxu0 0
    %831 = vmatpush2.bf16.xpose.msra.mxu0 0
    %832 = vmatprep.subr.bf16.mxu0 0
    %833 = vmatpush2.bf16.xpose.msra.mxu0 0
    %834 = vmatprep.subr.bf16.mxu0 0
    %835 = vmatpush2.bf16.xpose.msra.mxu0 0
    %836 = vmatprep.subr.bf16.mxu0 0
    %837 = vmatpush2.bf16.xpose.msra.mxu0 0
    %838 = vmatprep.subr.bf16.mxu0 0
    %839 = vmatpush2.bf16.xpose.msra.mxu0 0
    %840 = vmatprep.subr.bf16.mxu0 0
    %841 = vmatpush2.bf16.xpose.msra.mxu0 0
    %842 = vmatprep.mubr.bf16.mxu0 0
    %843 = vmatmul.mubr.bf16.gmra.mxu0 %v805
    %v844 = vpop.f32.mrf.mxu0
    %v845 = vadd.f32 0.0, %v844
    %v846 = vpop.f32.mrf.mxu0
    %v847 = vpop.f32.mrf.mxu0
    %v848 = vpop.f32.mrf.mxu0
    %849 = vdwg.mxu0
    %v851 = vsel %vm375, %v659, 0
    %v854 = vsel %vm375, %v731, 0
    %856 = vmatprep.subr.bf16.mxu0 0
    %857 = vmatpush1.bf16.xpose.msra.mxu0 0
    %858 = vmatprep.subr.bf16.mxu0 0
    %859 = vmatpush1.bf16.xpose.msra.mxu0 0
    %860 = vmatprep.subr.bf16.mxu0 0
    %861 = vmatpush1.bf16.xpose.msra.mxu0 0
    %862 = vmatprep.subr.bf16.mxu0 0
    %863 = vmatpush1.bf16.xpose.msra.mxu0 0
    %864 = vmatprep.subr.bf16.mxu0 0
    %865 = vmatpush1.bf16.xpose.msra.mxu0 0
    %866 = vmatprep.subr.bf16.mxu0 0
    %867 = vmatpush1.bf16.xpose.msra.mxu0 0
    %868 = vmatprep.subr.bf16.mxu0 0
    %869 = vmatpush1.bf16.xpose.msra.mxu0 0
    %870 = vmatprep.subr.bf16.mxu0 0
    %871 = vmatpush1.bf16.xpose.msra.mxu0 %v854
    %872 = vmatprep.subr.bf16.mxu0 0
    %873 = vmatpush2.bf16.xpose.msra.mxu0 0
    %874 = vmatprep.subr.bf16.mxu0 0
    %875 = vmatpush2.bf16.xpose.msra.mxu0 0
    %876 = vmatprep.subr.bf16.mxu0 0
    %877 = vmatpush2.bf16.xpose.msra.mxu0 0
    %878 = vmatprep.subr.bf16.mxu0 0
    %879 = vmatpush2.bf16.xpose.msra.mxu0 0
    %880 = vmatprep.subr.bf16.mxu0 0
    %881 = vmatpush2.bf16.xpose.msra.mxu0 0
    %882 = vmatprep.subr.bf16.mxu0 0
    %883 = vmatpush2.bf16.xpose.msra.mxu0 0
    %884 = vmatprep.subr.bf16.mxu0 0
    %885 = vmatpush2.bf16.xpose.msra.mxu0 0
    %886 = vmatprep.subr.bf16.mxu0 0
    %887 = vmatpush2.bf16.xpose.msra.mxu0 0
    %888 = vmatprep.mubr.bf16.mxu0 0
    %889 = vmatmul.mubr.bf16.gmra.mxu0 %v851
    %v890 = vpop.f32.mrf.mxu0
    %v891 = vadd.f32 0.0, %v890
    %v892 = vpop.f32.mrf.mxu0
    %v893 = vpop.f32.mrf.mxu0
    %v894 = vpop.f32.mrf.mxu0
    %895 = vdwg.mxu0
    %v896 = vsel %vm375, %v845, -inf
    %897 = vmax.xlane.f32.xlu0 %v896
    %v898 = vpop.xlane.xlu0 %897
    %v899 = vsel %vm375, %v891, -inf
    %900 = vmax.xlane.f32.xlu0 %v899
    %v901 = vpop.xlane.xlu0 %900
    %v902 = vsub.f32 %v845, %v898
    %v903 = vsub.f32 %v891, %v901
    %v904 = vmul.f32 %v902, 1.442695
    %v905 = vpow.pop %v904
    %v906 = vmul.f32 %v903, 1.442695
    %v907 = vpow.pop %v906
    %v908 = vsel %vm375, %v905, 0.0
    %909 = vadd.xlane.f32.xlu0 %v908
    %v910 = vpop.xlane.xlu0 %909
    %v911 = vsel %vm375, %v907, 0.0
    %912 = vadd.xlane.f32.xlu0 %v911
    %v913 = vpop.xlane.xlu0 %912
    %v914 = vrcp.pop %v910
    %v915 = vrcp.pop %v913
    %v916 = vmul.f32 %v905, %v914
    %v917 = vmul.f32 %v907, %v915
    %v918 = vpack.c.bf16 %v916, %v916
    %v919 = vpack.c.bf16 %v917, %v917
    %v921 = vsel %vm375, %v918, 0
    %v924 = vsel %vm495, %v802, 0
    %926 = vmatprep.subr.bf16.mxu0 0
    %927 = vmatpush1.bf16.msra.mxu0 0
    %928 = vmatprep.subr.bf16.mxu0 0
    %929 = vmatpush1.bf16.msra.mxu0 0
    %930 = vmatprep.subr.bf16.mxu0 0
    %931 = vmatpush1.bf16.msra.mxu0 0
    %932 = vmatprep.subr.bf16.mxu0 0
    %933 = vmatpush1.bf16.msra.mxu0 0
    %934 = vmatprep.subr.bf16.mxu0 0
    %935 = vmatpush1.bf16.msra.mxu0 0
    %936 = vmatprep.subr.bf16.mxu0 0
    %937 = vmatpush1.bf16.msra.mxu0 0
    %938 = vmatprep.subr.bf16.mxu0 0
    %939 = vmatpush1.bf16.msra.mxu0 0
    %940 = vmatprep.subr.bf16.mxu0 0
    %941 = vmatpush1.bf16.msra.mxu0 %v924
    %942 = vmatprep.subr.bf16.mxu0 0
    %943 = vmatpush2.bf16.msra.mxu0 0
    %944 = vmatprep.subr.bf16.mxu0 0
    %945 = vmatpush2.bf16.msra.mxu0 0
    %946 = vmatprep.subr.bf16.mxu0 0
    %947 = vmatpush2.bf16.msra.mxu0 0
    %948 = vmatprep.subr.bf16.mxu0 0
    %949 = vmatpush2.bf16.msra.mxu0 0
    %950 = vmatprep.subr.bf16.mxu0 0
    %951 = vmatpush2.bf16.msra.mxu0 0
    %952 = vmatprep.subr.bf16.mxu0 0
    %953 = vmatpush2.bf16.msra.mxu0 0
    %954 = vmatprep.subr.bf16.mxu0 0
    %955 = vmatpush2.bf16.msra.mxu0 0
    %956 = vmatprep.subr.bf16.mxu0 0
    %957 = vmatpush2.bf16.msra.mxu0 0
    %958 = vmatprep.mubr.bf16.mxu0 0
    %959 = vmatmul.mubr.bf16.gmra.mxu0 %v921
    %v960 = vpop.f32.mrf.mxu0
    %v961 = vadd.f32 0.0, %v960
    %v962 = vpop.f32.mrf.mxu0
    %v963 = vpop.f32.mrf.mxu0
    %v964 = vpop.f32.mrf.mxu0
    %965 = vdwg.mxu0
    %v967 = vsel %vm375, %v919, 0
    %v970 = vsel %vm495, %v803, 0
    %972 = vmatprep.subr.bf16.mxu0 0
    %973 = vmatpush1.bf16.msra.mxu0 0
    %974 = vmatprep.subr.bf16.mxu0 0
    %975 = vmatpush1.bf16.msra.mxu0 0
    %976 = vmatprep.subr.bf16.mxu0 0
    %977 = vmatpush1.bf16.msra.mxu0 0
    %978 = vmatprep.subr.bf16.mxu0 0
    %979 = vmatpush1.bf16.msra.mxu0 0
    %980 = vmatprep.subr.bf16.mxu0 0
    %981 = vmatpush1.bf16.msra.mxu0 0
    %982 = vmatprep.subr.bf16.mxu0 0
    %983 = vmatpush1.bf16.msra.mxu0 0
    %984 = vmatprep.subr.bf16.mxu0 0
    %985 = vmatpush1.bf16.msra.mxu0 0
    %986 = vmatprep.subr.bf16.mxu0 0
    %987 = vmatpush1.bf16.msra.mxu0 %v970
    %988 = vmatprep.subr.bf16.mxu0 0
    %989 = vmatpush2.bf16.msra.mxu0 0
    %990 = vmatprep.subr.bf16.mxu0 0
    %991 = vmatpush2.bf16.msra.mxu0 0
    %992 = vmatprep.subr.bf16.mxu0 0
    %993 = vmatpush2.bf16.msra.mxu0 0
    %994 = vmatprep.subr.bf16.mxu0 0
    %995 = vmatpush2.bf16.msra.mxu0 0
    %996 = vmatprep.subr.bf16.mxu0 0
    %997 = vmatpush2.bf16.msra.mxu0 0
    %998 = vmatprep.subr.bf16.mxu0 0
    %999 = vmatpush2.bf16.msra.mxu0 0
    %1000 = vmatprep.subr.bf16.mxu0 0
    %1001 = vmatpush2.bf16.msra.mxu0 0
    %1002 = vmatprep.subr.bf16.mxu0 0
    %1003 = vmatpush2.bf16.msra.mxu0 0
    %1004 = vmatprep.mubr.bf16.mxu0 0
    %1005 = vmatmul.mubr.bf16.gmra.mxu0 %v967
    %v1006 = vpop.f32.mrf.mxu0
    %v1007 = vadd.f32 0.0, %v1006
    %v1008 = vpop.f32.mrf.mxu0
    %v1009 = vpop.f32.mrf.mxu0
    %v1010 = vpop.f32.mrf.mxu0
    %1011 = vdwg.mxu0
    %v1012 = vpack.c.bf16 %v961, %v961
    %v1013 = vpack.c.bf16 %v1007, %v1007
    %s1014 = scalar_lea.vmem %s8, 4
    %v1015 = vld [vmem:[%s1014] sm:$0xf]
    %v1018 = vunpack.c.l.b16 %v1012
    %v1019 = vunpack.c.l.b16 %v1013
    %v1020 = vpack.c.b16 %v1019, %v1018
    %v1022 = vsel %vm375, %v1020, 0
    %v1025 = vsel %vm495, %v1015, 0
    %1027 = vmatprep.subr.bf16.mxu0 0
    %1028 = vmatpush1.bf16.msra.mxu0 0
    %1029 = vmatprep.subr.bf16.mxu0 0
    %1030 = vmatpush1.bf16.msra.mxu0 0
    %1031 = vmatprep.subr.bf16.mxu0 0
    %1032 = vmatpush1.bf16.msra.mxu0 0
    %1033 = vmatprep.subr.bf16.mxu0 0
    %1034 = vmatpush1.bf16.msra.mxu0 0
    %1035 = vmatprep.subr.bf16.mxu0 0
    %1036 = vmatpush1.bf16.msra.mxu0 0
    %1037 = vmatprep.subr.bf16.mxu0 0
    %1038 = vmatpush1.bf16.msra.mxu0 0
    %1039 = vmatprep.subr.bf16.mxu0 0
    %1040 = vmatpush1.bf16.msra.mxu0 0
    %1041 = vmatprep.subr.bf16.mxu0 0
    %1042 = vmatpush1.bf16.msra.mxu0 %v1025
    %1043 = vmatprep.subr.bf16.mxu0 0
    %1044 = vmatpush2.bf16.msra.mxu0 0
    %1045 = vmatprep.subr.bf16.mxu0 0
    %1046 = vmatpush2.bf16.msra.mxu0 0
    %1047 = vmatprep.subr.bf16.mxu0 0
    %1048 = vmatpush2.bf16.msra.mxu0 0
    %1049 = vmatprep.subr.bf16.mxu0 0
    %1050 = vmatpush2.bf16.msra.mxu0 0
    %1051 = vmatprep.subr.bf16.mxu0 0
    %1052 = vmatpush2.bf16.msra.mxu0 0
    %1053 = vmatprep.subr.bf16.mxu0 0
    %1054 = vmatpush2.bf16.msra.mxu0 0
    %1055 = vmatprep.subr.bf16.mxu0 0
    %1056 = vmatpush2.bf16.msra.mxu0 0
    %1057 = vmatprep.subr.bf16.mxu0 0
    %1058 = vmatpush2.bf16.msra.mxu0 0
    %1059 = vmatprep.mubr.bf16.mxu0 0
    %1060 = vmatmul.mubr.bf16.gmra.mxu0 %v1022
    %v1061 = vpop.f32.mrf.mxu0
    %v1062 = vadd.f32 0.0, %v1061
    %v1063 = vpop.f32.mrf.mxu0
    %v1064 = vpop.f32.mrf.mxu0
    %v1065 = vadd.f32 0.0, %v1064
    %v1066 = vpop.f32.mrf.mxu0
    %1067 = vdwg.mxu0
    %v1070 = vunpack.c.l.b16 %v585
    %v1071 = vunpack.c.l.b16 %v586
    %v1072 = vpack.c.b16 %v1071, %v1070
    %v1074 = vsel %vm375, %v1072, 0
    %v1077 = vsel %vm495, %v587, 0
    %1079 = vmatprep.subr.bf16.mxu0 0
    %1080 = vmatpush1.bf16.msra.mxu0 0
    %1081 = vmatprep.subr.bf16.mxu0 0
    %1082 = vmatpush1.bf16.msra.mxu0 0
    %1083 = vmatprep.subr.bf16.mxu0 0
    %1084 = vmatpush1.bf16.msra.mxu0 0
    %1085 = vmatprep.subr.bf16.mxu0 0
    %1086 = vmatpush1.bf16.msra.mxu0 0
    %1087 = vmatprep.subr.bf16.mxu0 0
    %1088 = vmatpush1.bf16.msra.mxu0 0
    %1089 = vmatprep.subr.bf16.mxu0 0
    %1090 = vmatpush1.bf16.msra.mxu0 0
    %1091 = vmatprep.subr.bf16.mxu0 0
    %1092 = vmatpush1.bf16.msra.mxu0 0
    %1093 = vmatprep.subr.bf16.mxu0 0
    %1094 = vmatpush1.bf16.msra.mxu0 %v1077
    %1095 = vmatprep.subr.bf16.mxu0 0
    %1096 = vmatpush2.bf16.msra.mxu0 0
    %1097 = vmatprep.subr.bf16.mxu0 0
    %1098 = vmatpush2.bf16.msra.mxu0 0
    %1099 = vmatprep.subr.bf16.mxu0 0
    %1100 = vmatpush2.bf16.msra.mxu0 0
    %1101 = vmatprep.subr.bf16.mxu0 0
    %1102 = vmatpush2.bf16.msra.mxu0 0
    %1103 = vmatprep.subr.bf16.mxu0 0
    %1104 = vmatpush2.bf16.msra.mxu0 0
    %1105 = vmatprep.subr.bf16.mxu0 0
    %1106 = vmatpush2.bf16.msra.mxu0 0
    %1107 = vmatprep.subr.bf16.mxu0 0
    %1108 = vmatpush2.bf16.msra.mxu0 0
    %1109 = vmatprep.subr.bf16.mxu0 0
    %1110 = vmatpush2.bf16.msra.mxu0 0
    %1111 = vmatprep.mubr.bf16.mxu0 0
    %1112 = vmatmul.mubr.bf16.gmra.mxu0 %v1074
    %v1113 = vpop.f32.mrf.mxu0
    %v1114 = vadd.f32 %v1062, %v1113
    %v1115 = vpop.f32.mrf.mxu0
    %v1116 = vpop.f32.mrf.mxu0
    %v1117 = vadd.f32 %v1065, %v1116
    %v1118 = vpop.f32.mrf.mxu0
    %1119 = vdwg.mxu0
    %s1120 = scalar_lea.vmem %s2, 32
    %v1121 = vld [vmem:[%s1120] sm:$0xf]
    %v1122 = vld [vmem:[%s1120 + $0x4] sm:$0xf]
    %v1123 = vld [vmem:[%s1120 + $0x8] sm:$0xf]
    %v1124 = vld [vmem:[%s1120 + $0xc] sm:$0xf]
    %s1125 = scalar_lea.vmem %s3, 2
    %v1126 = vld [vmem:[%s1125] sm:$0x1]
    %v1128 = vlaneseq
    %v1129 = vshrl.u32 %v1128, 7
    %v1130 = vsub.s32 0, %v1129
    %v1131 = vrot.slane %v1126, %v1130
    %v1137 = vunpack.c.l.b16 %v1121
    %v1138 = vunpack.c.l.b16 %v1122
    %v1139 = vunpack.c.l.b16 %v1123
    %v1140 = vunpack.c.l.b16 %v1124
    %v1141 = vpack.c.b16 %v1138, %v1137
    %v1142 = vpack.c.b16 %v1140, %v1139
    %1145 = vmatprep.subr.bf16.mxu0 0
    %1146 = vmatpush1.bf16.msra.mxu0 0
    %1147 = vmatprep.subr.bf16.mxu0 0
    %1148 = vmatpush1.bf16.msra.mxu0 0
    %1149 = vmatprep.subr.bf16.mxu0 0
    %1150 = vmatpush1.bf16.msra.mxu0 0
    %1151 = vmatprep.subr.bf16.mxu0 0
    %1152 = vmatpush1.bf16.msra.mxu0 0
    %1153 = vmatprep.subr.bf16.mxu0 0
    %1154 = vmatpush1.bf16.msra.mxu0 0
    %1155 = vmatprep.subr.bf16.mxu0 0
    %1156 = vmatpush1.bf16.msra.mxu0 0
    %1157 = vmatprep.subr.bf16.mxu0 0
    %1158 = vmatpush1.bf16.msra.mxu0 %v1142
    %1159 = vmatprep.subr.bf16.mxu0 0
    %1160 = vmatpush1.bf16.msra.mxu0 %v1141
    %1161 = vmatprep.subr.bf16.mxu0 0
    %1162 = vmatpush2.bf16.msra.mxu0 0
    %1163 = vmatprep.subr.bf16.mxu0 0
    %1164 = vmatpush2.bf16.msra.mxu0 0
    %1165 = vmatprep.subr.bf16.mxu0 0
    %1166 = vmatpush2.bf16.msra.mxu0 0
    %1167 = vmatprep.subr.bf16.mxu0 0
    %1168 = vmatpush2.bf16.msra.mxu0 0
    %1169 = vmatprep.subr.bf16.mxu0 0
    %1170 = vmatpush2.bf16.msra.mxu0 0
    %1171 = vmatprep.subr.bf16.mxu0 0
    %1172 = vmatpush2.bf16.msra.mxu0 0
    %1173 = vmatprep.subr.bf16.mxu0 0
    %1174 = vmatpush2.bf16.msra.mxu0 0
    %1175 = vmatprep.subr.bf16.mxu0 0
    %1176 = vmatpush2.bf16.msra.mxu0 0
    %1177 = vmatprep.mubr.bf16.mxu0 0
    %1178 = vmatmul.mubr.bf16.gmra.mxu0 %v183
    %v1179 = vpop.f32.mrf.mxu0
    %v1180 = vadd.f32 %v1131, %v1179
    %v1181 = vpop.f32.mrf.mxu0
    %v1182 = vpop.f32.mrf.mxu0
    %v1183 = vadd.f32 %v1131, %v1182
    %v1184 = vpop.f32.mrf.mxu0
    %1185 = vdwg.mxu0
    %v1186 = vpack.c.bf16 %v1183, %v1180
    %v1188 = vunpack.c.l.b16 %v1186
    %v1189 = vunpack.c.h.b16 %v1186
    %v1190 = vpack.c.b16 %v1188, %v1188
    %v1191 = vpack.c.b16 %v1189, %v1189
    %s1192 = scalar_lea.vmem %s4, 32
    %v1193 = vld [vmem:[%s1192] sm:$0xf]
    %v1194 = vld [vmem:[%s1192 + $0x4] sm:$0xf]
    %v1195 = vld [vmem:[%s1192 + $0x8] sm:$0xf]
    %v1196 = vld [vmem:[%s1192 + $0xc] sm:$0xf]
    %s1197 = scalar_lea.vmem %s5, 2
    %v1198 = vld [vmem:[%s1197] sm:$0x1]
    %v1200 = vlaneseq
    %v1201 = vshrl.u32 %v1200, 7
    %v1202 = vsub.s32 0, %v1201
    %v1203 = vrot.slane %v1198, %v1202
    %v1209 = vunpack.c.l.b16 %v1193
    %v1210 = vunpack.c.l.b16 %v1194
    %v1211 = vunpack.c.l.b16 %v1195
    %v1212 = vunpack.c.l.b16 %v1196
    %v1213 = vpack.c.b16 %v1210, %v1209
    %v1214 = vpack.c.b16 %v1212, %v1211
    %1217 = vmatprep.subr.bf16.mxu0 0
    %1218 = vmatpush1.bf16.msra.mxu0 0
    %1219 = vmatprep.subr.bf16.mxu0 0
    %1220 = vmatpush1.bf16.msra.mxu0 0
    %1221 = vmatprep.subr.bf16.mxu0 0
    %1222 = vmatpush1.bf16.msra.mxu0 0
    %1223 = vmatprep.subr.bf16.mxu0 0
    %1224 = vmatpush1.bf16.msra.mxu0 0
    %1225 = vmatprep.subr.bf16.mxu0 0
    %1226 = vmatpush1.bf16.msra.mxu0 0
    %1227 = vmatprep.subr.bf16.mxu0 0
    %1228 = vmatpush1.bf16.msra.mxu0 0
    %1229 = vmatprep.subr.bf16.mxu0 0
    %1230 = vmatpush1.bf16.msra.mxu0 %v1214
    %1231 = vmatprep.subr.bf16.mxu0 0
    %1232 = vmatpush1.bf16.msra.mxu0 %v1213
    %1233 = vmatprep.subr.bf16.mxu0 0
    %1234 = vmatpush2.bf16.msra.mxu0 0
    %1235 = vmatprep.subr.bf16.mxu0 0
    %1236 = vmatpush2.bf16.msra.mxu0 0
    %1237 = vmatprep.subr.bf16.mxu0 0
    %1238 = vmatpush2.bf16.msra.mxu0 0
    %1239 = vmatprep.subr.bf16.mxu0 0
    %1240 = vmatpush2.bf16.msra.mxu0 0
    %1241 = vmatprep.subr.bf16.mxu0 0
    %1242 = vmatpush2.bf16.msra.mxu0 0
    %1243 = vmatprep.subr.bf16.mxu0 0
    %1244 = vmatpush2.bf16.msra.mxu0 0
    %1245 = vmatprep.subr.bf16.mxu0 0
    %1246 = vmatpush2.bf16.msra.mxu0 0
    %1247 = vmatprep.subr.bf16.mxu0 0
    %1248 = vmatpush2.bf16.msra.mxu0 0
    %1249 = vmatprep.mubr.bf16.mxu0 0
    %1250 = vmatmul.mubr.bf16.gmra.mxu0 %v183
    %v1251 = vpop.f32.mrf.mxu0
    %v1252 = vadd.f32 %v1203, %v1251
    %v1253 = vpop.f32.mrf.mxu0
    %v1254 = vpop.f32.mrf.mxu0
    %v1255 = vadd.f32 %v1203, %v1254
    %v1256 = vpop.f32.mrf.mxu0
    %1257 = vdwg.mxu0
    %v1258 = vpack.c.bf16 %v1255, %v1252
    %v1260 = vunpack.c.l.b16 %v1258
    %v1261 = vunpack.c.h.b16 %v1258
    %v1262 = vpack.c.b16 %v1260, %v1260
    %v1263 = vpack.c.b16 %v1261, %v1261
    %s1264 = scalar_lea.vmem %s6, 32
    %v1265 = vld [vmem:[%s1264] sm:$0xf]
    %v1266 = vld [vmem:[%s1264 + $0x4] sm:$0xf]
    %v1267 = vld [vmem:[%s1264 + $0x8] sm:$0xf]
    %v1268 = vld [vmem:[%s1264 + $0xc] sm:$0xf]
    %s1269 = scalar_lea.vmem %s7, 2
    %v1270 = vld [vmem:[%s1269] sm:$0x1]
    %v1272 = vlaneseq
    %v1273 = vshrl.u32 %v1272, 7
    %v1274 = vsub.s32 0, %v1273
    %v1275 = vrot.slane %v1270, %v1274
    %v1281 = vunpack.c.l.b16 %v1265
    %v1282 = vunpack.c.l.b16 %v1266
    %v1283 = vunpack.c.l.b16 %v1267
    %v1284 = vunpack.c.l.b16 %v1268
    %v1285 = vpack.c.b16 %v1282, %v1281
    %v1286 = vpack.c.b16 %v1284, %v1283
    %1289 = vmatprep.subr.bf16.mxu0 0
    %1290 = vmatpush1.bf16.msra.mxu0 0
    %1291 = vmatprep.subr.bf16.mxu0 0
    %1292 = vmatpush1.bf16.msra.mxu0 0
    %1293 = vmatprep.subr.bf16.mxu0 0
    %1294 = vmatpush1.bf16.msra.mxu0 0
    %1295 = vmatprep.subr.bf16.mxu0 0
    %1296 = vmatpush1.bf16.msra.mxu0 0
    %1297 = vmatprep.subr.bf16.mxu0 0
    %1298 = vmatpush1.bf16.msra.mxu0 0
    %1299 = vmatprep.subr.bf16.mxu0 0
    %1300 = vmatpush1.bf16.msra.mxu0 0
    %1301 = vmatprep.subr.bf16.mxu0 0
    %1302 = vmatpush1.bf16.msra.mxu0 %v1286
    %1303 = vmatprep.subr.bf16.mxu0 0
    %1304 = vmatpush1.bf16.msra.mxu0 %v1285
    %1305 = vmatprep.subr.bf16.mxu0 0
    %1306 = vmatpush2.bf16.msra.mxu0 0
    %1307 = vmatprep.subr.bf16.mxu0 0
    %1308 = vmatpush2.bf16.msra.mxu0 0
    %1309 = vmatprep.subr.bf16.mxu0 0
    %1310 = vmatpush2.bf16.msra.mxu0 0
    %1311 = vmatprep.subr.bf16.mxu0 0
    %1312 = vmatpush2.bf16.msra.mxu0 0
    %1313 = vmatprep.subr.bf16.mxu0 0
    %1314 = vmatpush2.bf16.msra.mxu0 0
    %1315 = vmatprep.subr.bf16.mxu0 0
    %1316 = vmatpush2.bf16.msra.mxu0 0
    %1317 = vmatprep.subr.bf16.mxu0 0
    %1318 = vmatpush2.bf16.msra.mxu0 0
    %1319 = vmatprep.subr.bf16.mxu0 0
    %1320 = vmatpush2.bf16.msra.mxu0 0
    %1321 = vmatprep.mubr.bf16.mxu0 0
    %1322 = vmatmul.mubr.bf16.gmra.mxu0 %v326
    %v1323 = vpop.f32.mrf.mxu0
    %v1324 = vadd.f32 %v1275, %v1323
    %v1325 = vpop.f32.mrf.mxu0
    %v1326 = vpop.f32.mrf.mxu0
    %v1327 = vadd.f32 %v1275, %v1326
    %v1328 = vpop.f32.mrf.mxu0
    %1329 = vdwg.mxu0
    %v1330 = vpack.c.bf16 %v1327, %v1324
    %v1332 = vunpack.c.l.b16 %v1330
    %v1333 = vunpack.c.h.b16 %v1330
    %v1334 = vpack.c.b16 %v1332, %v1332
    %v1335 = vpack.c.b16 %v1333, %v1333
    %v1337 = vsel %vm375, %v1190, 0
    %v1340 = vsel %vm375, %v1262, 0
    %1342 = vmatprep.subr.bf16.mxu0 0
    %1343 = vmatpush1.bf16.xpose.msra.mxu0 0
    %1344 = vmatprep.subr.bf16.mxu0 0
    %1345 = vmatpush1.bf16.xpose.msra.mxu0 0
    %1346 = vmatprep.subr.bf16.mxu0 0
    %1347 = vmatpush1.bf16.xpose.msra.mxu0 0
    %1348 = vmatprep.subr.bf16.mxu0 0
    %1349 = vmatpush1.bf16.xpose.msra.mxu0 0
    %1350 = vmatprep.subr.bf16.mxu0 0
    %1351 = vmatpush1.bf16.xpose.msra.mxu0 0
    %1352 = vmatprep.subr.bf16.mxu0 0
    %1353 = vmatpush1.bf16.xpose.msra.mxu0 0
    %1354 = vmatprep.subr.bf16.mxu0 0
    %1355 = vmatpush1.bf16.xpose.msra.mxu0 0
    %1356 = vmatprep.subr.bf16.mxu0 0
    %1357 = vmatpush1.bf16.xpose.msra.mxu0 %v1340
    %1358 = vmatprep.subr.bf16.mxu0 0
    %1359 = vmatpush2.bf16.xpose.msra.mxu0 0
    %1360 = vmatprep.subr.bf16.mxu0 0
    %1361 = vmatpush2.bf16.xpose.msra.mxu0 0
    %1362 = vmatprep.subr.bf16.mxu0 0
    %1363 = vmatpush2.bf16.xpose.msra.mxu0 0
    %1364 = vmatprep.subr.bf16.mxu0 0
    %1365 = vmatpush2.bf16.xpose.msra.mxu0 0
    %1366 = vmatprep.subr.bf16.mxu0 0
    %1367 = vmatpush2.bf16.xpose.msra.mxu0 0
    %1368 = vmatprep.subr.bf16.mxu0 0
    %1369 = vmatpush2.bf16.xpose.msra.mxu0 0
    %1370 = vmatprep.subr.bf16.mxu0 0
    %1371 = vmatpush2.bf16.xpose.msra.mxu0 0
    %1372 = vmatprep.subr.bf16.mxu0 0
    %1373 = vmatpush2.bf16.xpose.msra.mxu0 0
    %1374 = vmatprep.mubr.bf16.mxu0 0
    %1375 = vmatmul.mubr.bf16.gmra.mxu0 %v1337
    %v1376 = vpop.f32.mrf.mxu0
    %v1377 = vadd.f32 0.0, %v1376
    %v1378 = vpop.f32.mrf.mxu0
    %v1379 = vpop.f32.mrf.mxu0
    %v1380 = vpop.f32.mrf.mxu0
    %1381 = vdwg.mxu0
    %v1383 = vsel %vm375, %v1191, 0
    %v1386 = vsel %vm375, %v1263, 0
    %1388 = vmatprep.subr.bf16.mxu0 0
    %1389 = vmatpush1.bf16.xpose.msra.mxu0 0
    %1390 = vmatprep.subr.bf16.mxu0 0
    %1391 = vmatpush1.bf16.xpose.msra.mxu0 0
    %1392 = vmatprep.subr.bf16.mxu0 0
    %1393 = vmatpush1.bf16.xpose.msra.mxu0 0
    %1394 = vmatprep.subr.bf16.mxu0 0
    %1395 = vmatpush1.bf16.xpose.msra.mxu0 0
    %1396 = vmatprep.subr.bf16.mxu0 0
    %1397 = vmatpush1.bf16.xpose.msra.mxu0 0
    %1398 = vmatprep.subr.bf16.mxu0 0
    %1399 = vmatpush1.bf16.xpose.msra.mxu0 0
    %1400 = vmatprep.subr.bf16.mxu0 0
    %1401 = vmatpush1.bf16.xpose.msra.mxu0 0
    %1402 = vmatprep.subr.bf16.mxu0 0
    %1403 = vmatpush1.bf16.xpose.msra.mxu0 %v1386
    %1404 = vmatprep.subr.bf16.mxu0 0
    %1405 = vmatpush2.bf16.xpose.msra.mxu0 0
    %1406 = vmatprep.subr.bf16.mxu0 0
    %1407 = vmatpush2.bf16.xpose.msra.mxu0 0
    %1408 = vmatprep.subr.bf16.mxu0 0
    %1409 = vmatpush2.bf16.xpose.msra.mxu0 0
    %1410 = vmatprep.subr.bf16.mxu0 0
    %1411 = vmatpush2.bf16.xpose.msra.mxu0 0
    %1412 = vmatprep.subr.bf16.mxu0 0
    %1413 = vmatpush2.bf16.xpose.msra.mxu0 0
    %1414 = vmatprep.subr.bf16.mxu0 0
    %1415 = vmatpush2.bf16.xpose.msra.mxu0 0
    %1416 = vmatprep.subr.bf16.mxu0 0
    %1417 = vmatpush2.bf16.xpose.msra.mxu0 0
    %1418 = vmatprep.subr.bf16.mxu0 0
    %1419 = vmatpush2.bf16.xpose.msra.mxu0 0
    %1420 = vmatprep.mubr.bf16.mxu0 0
    %1421 = vmatmul.mubr.bf16.gmra.mxu0 %v1383
    %v1422 = vpop.f32.mrf.mxu0
    %v1423 = vadd.f32 0.0, %v1422
    %v1424 = vpop.f32.mrf.mxu0
    %v1425 = vpop.f32.mrf.mxu0
    %v1426 = vpop.f32.mrf.mxu0
    %1427 = vdwg.mxu0
    %v1428 = vsel %vm375, %v1377, -inf
    %1429 = vmax.xlane.f32.xlu0 %v1428
    %v1430 = vpop.xlane.xlu0 %1429
    %v1431 = vsel %vm375, %v1423, -inf
    %1432 = vmax.xlane.f32.xlu0 %v1431
    %v1433 = vpop.xlane.xlu0 %1432
    %v1434 = vsub.f32 %v1377, %v1430
    %v1435 = vsub.f32 %v1423, %v1433
    %v1436 = vmul.f32 %v1434, 1.442695
    %v1437 = vpow.pop %v1436
    %v1438 = vmul.f32 %v1435, 1.442695
    %v1439 = vpow.pop %v1438
    %v1440 = vsel %vm375, %v1437, 0.0
    %1441 = vadd.xlane.f32.xlu0 %v1440
    %v1442 = vpop.xlane.xlu0 %1441
    %v1443 = vsel %vm375, %v1439, 0.0
    %1444 = vadd.xlane.f32.xlu0 %v1443
    %v1445 = vpop.xlane.xlu0 %1444
    %v1446 = vrcp.pop %v1442
    %v1447 = vrcp.pop %v1445
    %v1448 = vmul.f32 %v1437, %v1446
    %v1449 = vmul.f32 %v1439, %v1447
    %v1450 = vpack.c.bf16 %v1448, %v1448
    %v1451 = vpack.c.bf16 %v1449, %v1449
    %v1453 = vsel %vm375, %v1450, 0
    %v1456 = vsel %vm495, %v1334, 0
    %1458 = vmatprep.subr.bf16.mxu0 0
    %1459 = vmatpush1.bf16.msra.mxu0 0
    %1460 = vmatprep.subr.bf16.mxu0 0
    %1461 = vmatpush1.bf16.msra.mxu0 0
    %1462 = vmatprep.subr.bf16.mxu0 0
    %1463 = vmatpush1.bf16.msra.mxu0 0
    %1464 = vmatprep.subr.bf16.mxu0 0
    %1465 = vmatpush1.bf16.msra.mxu0 0
    %1466 = vmatprep.subr.bf16.mxu0 0
    %1467 = vmatpush1.bf16.msra.mxu0 0
    %1468 = vmatprep.subr.bf16.mxu0 0
    %1469 = vmatpush1.bf16.msra.mxu0 0
    %1470 = vmatprep.subr.bf16.mxu0 0
    %1471 = vmatpush1.bf16.msra.mxu0 0
    %1472 = vmatprep.subr.bf16.mxu0 0
    %1473 = vmatpush1.bf16.msra.mxu0 %v1456
    %1474 = vmatprep.subr.bf16.mxu0 0
    %1475 = vmatpush2.bf16.msra.mxu0 0
    %1476 = vmatprep.subr.bf16.mxu0 0
    %1477 = vmatpush2.bf16.msra.mxu0 0
    %1478 = vmatprep.subr.bf16.mxu0 0
    %1479 = vmatpush2.bf16.msra.mxu0 0
    %1480 = vmatprep.subr.bf16.mxu0 0
    %1481 = vmatpush2.bf16.msra.mxu0 0
    %1482 = vmatprep.subr.bf16.mxu0 0
    %1483 = vmatpush2.bf16.msra.mxu0 0
    %1484 = vmatprep.subr.bf16.mxu0 0
    %1485 = vmatpush2.bf16.msra.mxu0 0
    %1486 = vmatprep.subr.bf16.mxu0 0
    %1487 = vmatpush2.bf16.msra.mxu0 0
    %1488 = vmatprep.subr.bf16.mxu0 0
    %1489 = vmatpush2.bf16.msra.mxu0 0
    %1490 = vmatprep.mubr.bf16.mxu0 0
    %1491 = vmatmul.mubr.bf16.gmra.mxu0 %v1453
    %v1492 = vpop.f32.mrf.mxu0
    %v1493 = vadd.f32 0.0, %v1492
    %v1494 = vpop.f32.mrf.mxu0
    %v1495 = vpop.f32.mrf.mxu0
    %v1496 = vpop.f32.mrf.mxu0
    %1497 = vdwg.mxu0
    %v1499 = vsel %vm375, %v1451, 0
    %v1502 = vsel %vm495, %v1335, 0
    %1504 = vmatprep.subr.bf16.mxu0 0
    %1505 = vmatpush1.bf16.msra.mxu0 0
    %1506 = vmatprep.subr.bf16.mxu0 0
    %1507 = vmatpush1.bf16.msra.mxu0 0
    %1508 = vmatprep.subr.bf16.mxu0 0
    %1509 = vmatpush1.bf16.msra.mxu0 0
    %1510 = vmatprep.subr.bf16.mxu0 0
    %1511 = vmatpush1.bf16.msra.mxu0 0
    %1512 = vmatprep.subr.bf16.mxu0 0
    %1513 = vmatpush1.bf16.msra.mxu0 0
    %1514 = vmatprep.subr.bf16.mxu0 0
    %1515 = vmatpush1.bf16.msra.mxu0 0
    %1516 = vmatprep.subr.bf16.mxu0 0
    %1517 = vmatpush1.bf16.msra.mxu0 0
    %1518 = vmatprep.subr.bf16.mxu0 0
    %1519 = vmatpush1.bf16.msra.mxu0 %v1502
    %1520 = vmatprep.subr.bf16.mxu0 0
    %1521 = vmatpush2.bf16.msra.mxu0 0
    %1522 = vmatprep.subr.bf16.mxu0 0
    %1523 = vmatpush2.bf16.msra.mxu0 0
    %1524 = vmatprep.subr.bf16.mxu0 0
    %1525 = vmatpush2.bf16.msra.mxu0 0
    %1526 = vmatprep.subr.bf16.mxu0 0
    %1527 = vmatpush2.bf16.msra.mxu0 0
    %1528 = vmatprep.subr.bf16.mxu0 0
    %1529 = vmatpush2.bf16.msra.mxu0 0
    %1530 = vmatprep.subr.bf16.mxu0 0
    %1531 = vmatpush2.bf16.msra.mxu0 0
    %1532 = vmatprep.subr.bf16.mxu0 0
    %1533 = vmatpush2.bf16.msra.mxu0 0
    %1534 = vmatprep.subr.bf16.mxu0 0
    %1535 = vmatpush2.bf16.msra.mxu0 0
    %1536 = vmatprep.mubr.bf16.mxu0 0
    %1537 = vmatmul.mubr.bf16.gmra.mxu0 %v1499
    %v1538 = vpop.f32.mrf.mxu0
    %v1539 = vadd.f32 0.0, %v1538
    %v1540 = vpop.f32.mrf.mxu0
    %v1541 = vpop.f32.mrf.mxu0
    %v1542 = vpop.f32.mrf.mxu0
    %1543 = vdwg.mxu0
    %v1544 = vpack.c.bf16 %v1493, %v1493
    %v1545 = vpack.c.bf16 %v1539, %v1539
    %s1546 = scalar_lea.vmem %s8, 8
    %v1547 = vld [vmem:[%s1546] sm:$0xf]
    %v1550 = vunpack.c.l.b16 %v1544
    %v1551 = vunpack.c.l.b16 %v1545
    %v1552 = vpack.c.b16 %v1551, %v1550
    %v1554 = vsel %vm375, %v1552, 0
    %v1557 = vsel %vm495, %v1547, 0
    %1559 = vmatprep.subr.bf16.mxu0 0
    %1560 = vmatpush1.bf16.msra.mxu0 0
    %1561 = vmatprep.subr.bf16.mxu0 0
    %1562 = vmatpush1.bf16.msra.mxu0 0
    %1563 = vmatprep.subr.bf16.mxu0 0
    %1564 = vmatpush1.bf16.msra.mxu0 0
    %1565 = vmatprep.subr.bf16.mxu0 0
    %1566 = vmatpush1.bf16.msra.mxu0 0
    %1567 = vmatprep.subr.bf16.mxu0 0
    %1568 = vmatpush1.bf16.msra.mxu0 0
    %1569 = vmatprep.subr.bf16.mxu0 0
    %1570 = vmatpush1.bf16.msra.mxu0 0
    %1571 = vmatprep.subr.bf16.mxu0 0
    %1572 = vmatpush1.bf16.msra.mxu0 0
    %1573 = vmatprep.subr.bf16.mxu0 0
    %1574 = vmatpush1.bf16.msra.mxu0 %v1557
    %1575 = vmatprep.subr.bf16.mxu0 0
    %1576 = vmatpush2.bf16.msra.mxu0 0
    %1577 = vmatprep.subr.bf16.mxu0 0
    %1578 = vmatpush2.bf16.msra.mxu0 0
    %1579 = vmatprep.subr.bf16.mxu0 0
    %1580 = vmatpush2.bf16.msra.mxu0 0
    %1581 = vmatprep.subr.bf16.mxu0 0
    %1582 = vmatpush2.bf16.msra.mxu0 0
    %1583 = vmatprep.subr.bf16.mxu0 0
    %1584 = vmatpush2.bf16.msra.mxu0 0
    %1585 = vmatprep.subr.bf16.mxu0 0
    %1586 = vmatpush2.bf16.msra.mxu0 0
    %1587 = vmatprep.subr.bf16.mxu0 0
    %1588 = vmatpush2.bf16.msra.mxu0 0
    %1589 = vmatprep.subr.bf16.mxu0 0
    %1590 = vmatpush2.bf16.msra.mxu0 0
    %1591 = vmatprep.mubr.bf16.mxu0 0
    %1592 = vmatmul.mubr.bf16.gmra.mxu0 %v1554
    %v1593 = vpop.f32.mrf.mxu0
    %v1594 = vadd.f32 0.0, %v1593
    %v1595 = vpop.f32.mrf.mxu0
    %v1596 = vpop.f32.mrf.mxu0
    %v1597 = vadd.f32 0.0, %v1596
    %v1598 = vpop.f32.mrf.mxu0
    %1599 = vdwg.mxu0
    %v1600 = vadd.f32 %v1114, %v1594
    %v1601 = vadd.f32 %v1117, %v1597
    %s1602 = scalar_lea.vmem %s2, 48
    %v1603 = vld [vmem:[%s1602] sm:$0xf]
    %v1604 = vld [vmem:[%s1602 + $0x4] sm:$0xf]
    %v1605 = vld [vmem:[%s1602 + $0x8] sm:$0xf]
    %v1606 = vld [vmem:[%s1602 + $0xc] sm:$0xf]
    %s1607 = scalar_lea.vmem %s3, 3
    %v1608 = vld [vmem:[%s1607] sm:$0x1]
    %v1610 = vlaneseq
    %v1611 = vshrl.u32 %v1610, 7
    %v1612 = vsub.s32 0, %v1611
    %v1613 = vrot.slane %v1608, %v1612
    %v1619 = vunpack.c.l.b16 %v1603
    %v1620 = vunpack.c.l.b16 %v1604
    %v1621 = vunpack.c.l.b16 %v1605
    %v1622 = vunpack.c.l.b16 %v1606
    %v1623 = vpack.c.b16 %v1620, %v1619
    %v1624 = vpack.c.b16 %v1622, %v1621
    %1627 = vmatprep.subr.bf16.mxu0 0
    %1628 = vmatpush1.bf16.msra.mxu0 0
    %1629 = vmatprep.subr.bf16.mxu0 0
    %1630 = vmatpush1.bf16.msra.mxu0 0
    %1631 = vmatprep.subr.bf16.mxu0 0
    %1632 = vmatpush1.bf16.msra.mxu0 0
    %1633 = vmatprep.subr.bf16.mxu0 0
    %1634 = vmatpush1.bf16.msra.mxu0 0
    %1635 = vmatprep.subr.bf16.mxu0 0
    %1636 = vmatpush1.bf16.msra.mxu0 0
    %1637 = vmatprep.subr.bf16.mxu0 0
    %1638 = vmatpush1.bf16.msra.mxu0 0
    %1639 = vmatprep.subr.bf16.mxu0 0
    %1640 = vmatpush1.bf16.msra.mxu0 %v1624
    %1641 = vmatprep.subr.bf16.mxu0 0
    %1642 = vmatpush1.bf16.msra.mxu0 %v1623
    %1643 = vmatprep.subr.bf16.mxu0 0
    %1644 = vmatpush2.bf16.msra.mxu0 0
    %1645 = vmatprep.subr.bf16.mxu0 0
    %1646 = vmatpush2.bf16.msra.mxu0 0
    %1647 = vmatprep.subr.bf16.mxu0 0
    %1648 = vmatpush2.bf16.msra.mxu0 0
    %1649 = vmatprep.subr.bf16.mxu0 0
    %1650 = vmatpush2.bf16.msra.mxu0 0
    %1651 = vmatprep.subr.bf16.mxu0 0
    %1652 = vmatpush2.bf16.msra.mxu0 0
    %1653 = vmatprep.subr.bf16.mxu0 0
    %1654 = vmatpush2.bf16.msra.mxu0 0
    %1655 = vmatprep.subr.bf16.mxu0 0
    %1656 = vmatpush2.bf16.msra.mxu0 0
    %1657 = vmatprep.subr.bf16.mxu0 0
    %1658 = vmatpush2.bf16.msra.mxu0 0
    %1659 = vmatprep.mubr.bf16.mxu0 0
    %1660 = vmatmul.mubr.bf16.gmra.mxu0 %v183
    %v1661 = vpop.f32.mrf.mxu0
    %v1662 = vadd.f32 %v1613, %v1661
    %v1663 = vpop.f32.mrf.mxu0
    %v1664 = vpop.f32.mrf.mxu0
    %v1665 = vadd.f32 %v1613, %v1664
    %v1666 = vpop.f32.mrf.mxu0
    %1667 = vdwg.mxu0
    %v1668 = vpack.c.bf16 %v1665, %v1662
    %v1670 = vunpack.c.l.b16 %v1668
    %v1671 = vunpack.c.h.b16 %v1668
    %v1672 = vpack.c.b16 %v1670, %v1670
    %v1673 = vpack.c.b16 %v1671, %v1671
    %s1674 = scalar_lea.vmem %s4, 48
    %v1675 = vld [vmem:[%s1674] sm:$0xf]
    %v1676 = vld [vmem:[%s1674 + $0x4] sm:$0xf]
    %v1677 = vld [vmem:[%s1674 + $0x8] sm:$0xf]
    %v1678 = vld [vmem:[%s1674 + $0xc] sm:$0xf]
    %s1679 = scalar_lea.vmem %s5, 3
    %v1680 = vld [vmem:[%s1679] sm:$0x1]
    %v1682 = vlaneseq
    %v1683 = vshrl.u32 %v1682, 7
    %v1684 = vsub.s32 0, %v1683
    %v1685 = vrot.slane %v1680, %v1684
    %v1691 = vunpack.c.l.b16 %v1675
    %v1692 = vunpack.c.l.b16 %v1676
    %v1693 = vunpack.c.l.b16 %v1677
    %v1694 = vunpack.c.l.b16 %v1678
    %v1695 = vpack.c.b16 %v1692, %v1691
    %v1696 = vpack.c.b16 %v1694, %v1693
    %1699 = vmatprep.subr.bf16.mxu0 0
    %1700 = vmatpush1.bf16.msra.mxu0 0
    %1701 = vmatprep.subr.bf16.mxu0 0
    %1702 = vmatpush1.bf16.msra.mxu0 0
    %1703 = vmatprep.subr.bf16.mxu0 0
    %1704 = vmatpush1.bf16.msra.mxu0 0
    %1705 = vmatprep.subr.bf16.mxu0 0
    %1706 = vmatpush1.bf16.msra.mxu0 0
    %1707 = vmatprep.subr.bf16.mxu0 0
    %1708 = vmatpush1.bf16.msra.mxu0 0
    %1709 = vmatprep.subr.bf16.mxu0 0
    %1710 = vmatpush1.bf16.msra.mxu0 0
    %1711 = vmatprep.subr.bf16.mxu0 0
    %1712 = vmatpush1.bf16.msra.mxu0 %v1696
    %1713 = vmatprep.subr.bf16.mxu0 0
    %1714 = vmatpush1.bf16.msra.mxu0 %v1695
    %1715 = vmatprep.subr.bf16.mxu0 0
    %1716 = vmatpush2.bf16.msra.mxu0 0
    %1717 = vmatprep.subr.bf16.mxu0 0
    %1718 = vmatpush2.bf16.msra.mxu0 0
    %1719 = vmatprep.subr.bf16.mxu0 0
    %1720 = vmatpush2.bf16.msra.mxu0 0
    %1721 = vmatprep.subr.bf16.mxu0 0
    %1722 = vmatpush2.bf16.msra.mxu0 0
    %1723 = vmatprep.subr.bf16.mxu0 0
    %1724 = vmatpush2.bf16.msra.mxu0 0
    %1725 = vmatprep.subr.bf16.mxu0 0
    %1726 = vmatpush2.bf16.msra.mxu0 0
    %1727 = vmatprep.subr.bf16.mxu0 0
    %1728 = vmatpush2.bf16.msra.mxu0 0
    %1729 = vmatprep.subr.bf16.mxu0 0
    %1730 = vmatpush2.bf16.msra.mxu0 0
    %1731 = vmatprep.mubr.bf16.mxu0 0
    %1732 = vmatmul.mubr.bf16.gmra.mxu0 %v183
    %v1733 = vpop.f32.mrf.mxu0
    %v1734 = vadd.f32 %v1685, %v1733
    %v1735 = vpop.f32.mrf.mxu0
    %v1736 = vpop.f32.mrf.mxu0
    %v1737 = vadd.f32 %v1685, %v1736
    %v1738 = vpop.f32.mrf.mxu0
    %1739 = vdwg.mxu0
    %v1740 = vpack.c.bf16 %v1737, %v1734
    %v1742 = vunpack.c.l.b16 %v1740
    %v1743 = vunpack.c.h.b16 %v1740
    %v1744 = vpack.c.b16 %v1742, %v1742
    %v1745 = vpack.c.b16 %v1743, %v1743
    %s1746 = scalar_lea.vmem %s6, 48
    %v1747 = vld [vmem:[%s1746] sm:$0xf]
    %v1748 = vld [vmem:[%s1746 + $0x4] sm:$0xf]
    %v1749 = vld [vmem:[%s1746 + $0x8] sm:$0xf]
    %v1750 = vld [vmem:[%s1746 + $0xc] sm:$0xf]
    %s1751 = scalar_lea.vmem %s7, 3
    %v1752 = vld [vmem:[%s1751] sm:$0x1]
    %v1754 = vlaneseq
    %v1755 = vshrl.u32 %v1754, 7
    %v1756 = vsub.s32 0, %v1755
    %v1757 = vrot.slane %v1752, %v1756
    %v1763 = vunpack.c.l.b16 %v1747
    %v1764 = vunpack.c.l.b16 %v1748
    %v1765 = vunpack.c.l.b16 %v1749
    %v1766 = vunpack.c.l.b16 %v1750
    %v1767 = vpack.c.b16 %v1764, %v1763
    %v1768 = vpack.c.b16 %v1766, %v1765
    %1771 = vmatprep.subr.bf16.mxu0 0
    %1772 = vmatpush1.bf16.msra.mxu0 0
    %1773 = vmatprep.subr.bf16.mxu0 0
    %1774 = vmatpush1.bf16.msra.mxu0 0
    %1775 = vmatprep.subr.bf16.mxu0 0
    %1776 = vmatpush1.bf16.msra.mxu0 0
    %1777 = vmatprep.subr.bf16.mxu0 0
    %1778 = vmatpush1.bf16.msra.mxu0 0
    %1779 = vmatprep.subr.bf16.mxu0 0
    %1780 = vmatpush1.bf16.msra.mxu0 0
    %1781 = vmatprep.subr.bf16.mxu0 0
    %1782 = vmatpush1.bf16.msra.mxu0 0
    %1783 = vmatprep.subr.bf16.mxu0 0
    %1784 = vmatpush1.bf16.msra.mxu0 %v1768
    %1785 = vmatprep.subr.bf16.mxu0 0
    %1786 = vmatpush1.bf16.msra.mxu0 %v1767
    %1787 = vmatprep.subr.bf16.mxu0 0
    %1788 = vmatpush2.bf16.msra.mxu0 0
    %1789 = vmatprep.subr.bf16.mxu0 0
    %1790 = vmatpush2.bf16.msra.mxu0 0
    %1791 = vmatprep.subr.bf16.mxu0 0
    %1792 = vmatpush2.bf16.msra.mxu0 0
    %1793 = vmatprep.subr.bf16.mxu0 0
    %1794 = vmatpush2.bf16.msra.mxu0 0
    %1795 = vmatprep.subr.bf16.mxu0 0
    %1796 = vmatpush2.bf16.msra.mxu0 0
    %1797 = vmatprep.subr.bf16.mxu0 0
    %1798 = vmatpush2.bf16.msra.mxu0 0
    %1799 = vmatprep.subr.bf16.mxu0 0
    %1800 = vmatpush2.bf16.msra.mxu0 0
    %1801 = vmatprep.subr.bf16.mxu0 0
    %1802 = vmatpush2.bf16.msra.mxu0 0
    %1803 = vmatprep.mubr.bf16.mxu0 0
    %1804 = vmatmul.mubr.bf16.gmra.mxu0 %v326
    %v1805 = vpop.f32.mrf.mxu0
    %v1806 = vadd.f32 %v1757, %v1805
    %v1807 = vpop.f32.mrf.mxu0
    %v1808 = vpop.f32.mrf.mxu0
    %v1809 = vadd.f32 %v1757, %v1808
    %v1810 = vpop.f32.mrf.mxu0
    %1811 = vdwg.mxu0
    %v1812 = vpack.c.bf16 %v1809, %v1806
    %v1814 = vunpack.c.l.b16 %v1812
    %v1815 = vunpack.c.h.b16 %v1812
    %v1816 = vpack.c.b16 %v1814, %v1814
    %v1817 = vpack.c.b16 %v1815, %v1815
    %v1819 = vsel %vm375, %v1672, 0
    %v1822 = vsel %vm375, %v1744, 0
    %1824 = vmatprep.subr.bf16.mxu0 0
    %1825 = vmatpush1.bf16.xpose.msra.mxu0 0
    %1826 = vmatprep.subr.bf16.mxu0 0
    %1827 = vmatpush1.bf16.xpose.msra.mxu0 0
    %1828 = vmatprep.subr.bf16.mxu0 0
    %1829 = vmatpush1.bf16.xpose.msra.mxu0 0
    %1830 = vmatprep.subr.bf16.mxu0 0
    %1831 = vmatpush1.bf16.xpose.msra.mxu0 0
    %1832 = vmatprep.subr.bf16.mxu0 0
    %1833 = vmatpush1.bf16.xpose.msra.mxu0 0
    %1834 = vmatprep.subr.bf16.mxu0 0
    %1835 = vmatpush1.bf16.xpose.msra.mxu0 0
    %1836 = vmatprep.subr.bf16.mxu0 0
    %1837 = vmatpush1.bf16.xpose.msra.mxu0 0
    %1838 = vmatprep.subr.bf16.mxu0 0
    %1839 = vmatpush1.bf16.xpose.msra.mxu0 %v1822
    %1840 = vmatprep.subr.bf16.mxu0 0
    %1841 = vmatpush2.bf16.xpose.msra.mxu0 0
    %1842 = vmatprep.subr.bf16.mxu0 0
    %1843 = vmatpush2.bf16.xpose.msra.mxu0 0
    %1844 = vmatprep.subr.bf16.mxu0 0
    %1845 = vmatpush2.bf16.xpose.msra.mxu0 0
    %1846 = vmatprep.subr.bf16.mxu0 0
    %1847 = vmatpush2.bf16.xpose.msra.mxu0 0
    %1848 = vmatprep.subr.bf16.mxu0 0
    %1849 = vmatpush2.bf16.xpose.msra.mxu0 0
    %1850 = vmatprep.subr.bf16.mxu0 0
    %1851 = vmatpush2.bf16.xpose.msra.mxu0 0
    %1852 = vmatprep.subr.bf16.mxu0 0
    %1853 = vmatpush2.bf16.xpose.msra.mxu0 0
    %1854 = vmatprep.subr.bf16.mxu0 0
    %1855 = vmatpush2.bf16.xpose.msra.mxu0 0
    %1856 = vmatprep.mubr.bf16.mxu0 0
    %1857 = vmatmul.mubr.bf16.gmra.mxu0 %v1819
    %v1858 = vpop.f32.mrf.mxu0
    %v1859 = vadd.f32 0.0, %v1858
    %v1860 = vpop.f32.mrf.mxu0
    %v1861 = vpop.f32.mrf.mxu0
    %v1862 = vpop.f32.mrf.mxu0
    %1863 = vdwg.mxu0
    %v1865 = vsel %vm375, %v1673, 0
    %v1868 = vsel %vm375, %v1745, 0
    %1870 = vmatprep.subr.bf16.mxu0 0
    %1871 = vmatpush1.bf16.xpose.msra.mxu0 0
    %1872 = vmatprep.subr.bf16.mxu0 0
    %1873 = vmatpush1.bf16.xpose.msra.mxu0 0
    %1874 = vmatprep.subr.bf16.mxu0 0
    %1875 = vmatpush1.bf16.xpose.msra.mxu0 0
    %1876 = vmatprep.subr.bf16.mxu0 0
    %1877 = vmatpush1.bf16.xpose.msra.mxu0 0
    %1878 = vmatprep.subr.bf16.mxu0 0
    %1879 = vmatpush1.bf16.xpose.msra.mxu0 0
    %1880 = vmatprep.subr.bf16.mxu0 0
    %1881 = vmatpush1.bf16.xpose.msra.mxu0 0
    %1882 = vmatprep.subr.bf16.mxu0 0
    %1883 = vmatpush1.bf16.xpose.msra.mxu0 0
    %1884 = vmatprep.subr.bf16.mxu0 0
    %1885 = vmatpush1.bf16.xpose.msra.mxu0 %v1868
    %1886 = vmatprep.subr.bf16.mxu0 0
    %1887 = vmatpush2.bf16.xpose.msra.mxu0 0
    %1888 = vmatprep.subr.bf16.mxu0 0
    %1889 = vmatpush2.bf16.xpose.msra.mxu0 0
    %1890 = vmatprep.subr.bf16.mxu0 0
    %1891 = vmatpush2.bf16.xpose.msra.mxu0 0
    %1892 = vmatprep.subr.bf16.mxu0 0
    %1893 = vmatpush2.bf16.xpose.msra.mxu0 0
    %1894 = vmatprep.subr.bf16.mxu0 0
    %1895 = vmatpush2.bf16.xpose.msra.mxu0 0
    %1896 = vmatprep.subr.bf16.mxu0 0
    %1897 = vmatpush2.bf16.xpose.msra.mxu0 0
    %1898 = vmatprep.subr.bf16.mxu0 0
    %1899 = vmatpush2.bf16.xpose.msra.mxu0 0
    %1900 = vmatprep.subr.bf16.mxu0 0
    %1901 = vmatpush2.bf16.xpose.msra.mxu0 0
    %1902 = vmatprep.mubr.bf16.mxu0 0
    %1903 = vmatmul.mubr.bf16.gmra.mxu0 %v1865
    %v1904 = vpop.f32.mrf.mxu0
    %v1905 = vadd.f32 0.0, %v1904
    %v1906 = vpop.f32.mrf.mxu0
    %v1907 = vpop.f32.mrf.mxu0
    %v1908 = vpop.f32.mrf.mxu0
    %1909 = vdwg.mxu0
    %v1910 = vsel %vm375, %v1859, -inf
    %1911 = vmax.xlane.f32.xlu0 %v1910
    %v1912 = vpop.xlane.xlu0 %1911
    %v1913 = vsel %vm375, %v1905, -inf
    %1914 = vmax.xlane.f32.xlu0 %v1913
    %v1915 = vpop.xlane.xlu0 %1914
    %v1916 = vsub.f32 %v1859, %v1912
    %v1917 = vsub.f32 %v1905, %v1915
    %v1918 = vmul.f32 %v1916, 1.442695
    %v1919 = vpow.pop %v1918
    %v1920 = vmul.f32 %v1917, 1.442695
    %v1921 = vpow.pop %v1920
    %v1922 = vsel %vm375, %v1919, 0.0
    %1923 = vadd.xlane.f32.xlu0 %v1922
    %v1924 = vpop.xlane.xlu0 %1923
    %v1925 = vsel %vm375, %v1921, 0.0
    %1926 = vadd.xlane.f32.xlu0 %v1925
    %v1927 = vpop.xlane.xlu0 %1926
    %v1928 = vrcp.pop %v1924
    %v1929 = vrcp.pop %v1927
    %v1930 = vmul.f32 %v1919, %v1928
    %v1931 = vmul.f32 %v1921, %v1929
    %v1932 = vpack.c.bf16 %v1930, %v1930
    %v1933 = vpack.c.bf16 %v1931, %v1931
    %v1935 = vsel %vm375, %v1932, 0
    %v1938 = vsel %vm495, %v1816, 0
    %1940 = vmatprep.subr.bf16.mxu0 0
    %1941 = vmatpush1.bf16.msra.mxu0 0
    %1942 = vmatprep.subr.bf16.mxu0 0
    %1943 = vmatpush1.bf16.msra.mxu0 0
    %1944 = vmatprep.subr.bf16.mxu0 0
    %1945 = vmatpush1.bf16.msra.mxu0 0
    %1946 = vmatprep.subr.bf16.mxu0 0
    %1947 = vmatpush1.bf16.msra.mxu0 0
    %1948 = vmatprep.subr.bf16.mxu0 0
    %1949 = vmatpush1.bf16.msra.mxu0 0
    %1950 = vmatprep.subr.bf16.mxu0 0
    %1951 = vmatpush1.bf16.msra.mxu0 0
    %1952 = vmatprep.subr.bf16.mxu0 0
    %1953 = vmatpush1.bf16.msra.mxu0 0
    %1954 = vmatprep.subr.bf16.mxu0 0
    %1955 = vmatpush1.bf16.msra.mxu0 %v1938
    %1956 = vmatprep.subr.bf16.mxu0 0
    %1957 = vmatpush2.bf16.msra.mxu0 0
    %1958 = vmatprep.subr.bf16.mxu0 0
    %1959 = vmatpush2.bf16.msra.mxu0 0
    %1960 = vmatprep.subr.bf16.mxu0 0
    %1961 = vmatpush2.bf16.msra.mxu0 0
    %1962 = vmatprep.subr.bf16.mxu0 0
    %1963 = vmatpush2.bf16.msra.mxu0 0
    %1964 = vmatprep.subr.bf16.mxu0 0
    %1965 = vmatpush2.bf16.msra.mxu0 0
    %1966 = vmatprep.subr.bf16.mxu0 0
    %1967 = vmatpush2.bf16.msra.mxu0 0
    %1968 = vmatprep.subr.bf16.mxu0 0
    %1969 = vmatpush2.bf16.msra.mxu0 0
    %1970 = vmatprep.subr.bf16.mxu0 0
    %1971 = vmatpush2.bf16.msra.mxu0 0
    %1972 = vmatprep.mubr.bf16.mxu0 0
    %1973 = vmatmul.mubr.bf16.gmra.mxu0 %v1935
    %v1974 = vpop.f32.mrf.mxu0
    %v1975 = vadd.f32 0.0, %v1974
    %v1976 = vpop.f32.mrf.mxu0
    %v1977 = vpop.f32.mrf.mxu0
    %v1978 = vpop.f32.mrf.mxu0
    %1979 = vdwg.mxu0
    %v1981 = vsel %vm375, %v1933, 0
    %v1984 = vsel %vm495, %v1817, 0
    %1986 = vmatprep.subr.bf16.mxu0 0
    %1987 = vmatpush1.bf16.msra.mxu0 0
    %1988 = vmatprep.subr.bf16.mxu0 0
    %1989 = vmatpush1.bf16.msra.mxu0 0
    %1990 = vmatprep.subr.bf16.mxu0 0
    %1991 = vmatpush1.bf16.msra.mxu0 0
    %1992 = vmatprep.subr.bf16.mxu0 0
    %1993 = vmatpush1.bf16.msra.mxu0 0
    %1994 = vmatprep.subr.bf16.mxu0 0
    %1995 = vmatpush1.bf16.msra.mxu0 0
    %1996 = vmatprep.subr.bf16.mxu0 0
    %1997 = vmatpush1.bf16.msra.mxu0 0
    %1998 = vmatprep.subr.bf16.mxu0 0
    %1999 = vmatpush1.bf16.msra.mxu0 0
    %2000 = vmatprep.subr.bf16.mxu0 0
    %2001 = vmatpush1.bf16.msra.mxu0 %v1984
    %2002 = vmatprep.subr.bf16.mxu0 0
    %2003 = vmatpush2.bf16.msra.mxu0 0
    %2004 = vmatprep.subr.bf16.mxu0 0
    %2005 = vmatpush2.bf16.msra.mxu0 0
    %2006 = vmatprep.subr.bf16.mxu0 0
    %2007 = vmatpush2.bf16.msra.mxu0 0
    %2008 = vmatprep.subr.bf16.mxu0 0
    %2009 = vmatpush2.bf16.msra.mxu0 0
    %2010 = vmatprep.subr.bf16.mxu0 0
    %2011 = vmatpush2.bf16.msra.mxu0 0
    %2012 = vmatprep.subr.bf16.mxu0 0
    %2013 = vmatpush2.bf16.msra.mxu0 0
    %2014 = vmatprep.subr.bf16.mxu0 0
    %2015 = vmatpush2.bf16.msra.mxu0 0
    %2016 = vmatprep.subr.bf16.mxu0 0
    %2017 = vmatpush2.bf16.msra.mxu0 0
    %2018 = vmatprep.mubr.bf16.mxu0 0
    %2019 = vmatmul.mubr.bf16.gmra.mxu0 %v1981
    %v2020 = vpop.f32.mrf.mxu0
    %v2021 = vadd.f32 0.0, %v2020
    %v2022 = vpop.f32.mrf.mxu0
    %v2023 = vpop.f32.mrf.mxu0
    %v2024 = vpop.f32.mrf.mxu0
    %2025 = vdwg.mxu0
    %v2026 = vpack.c.bf16 %v1975, %v1975
    %v2027 = vpack.c.bf16 %v2021, %v2021
    %s2028 = scalar_lea.vmem %s8, 12
    %v2029 = vld [vmem:[%s2028] sm:$0xf]
    %v2032 = vunpack.c.l.b16 %v2026
    %v2033 = vunpack.c.l.b16 %v2027
    %v2034 = vpack.c.b16 %v2033, %v2032
    %v2036 = vsel %vm375, %v2034, 0
    %v2039 = vsel %vm495, %v2029, 0
    %2041 = vmatprep.subr.bf16.mxu0 0
    %2042 = vmatpush1.bf16.msra.mxu0 0
    %2043 = vmatprep.subr.bf16.mxu0 0
    %2044 = vmatpush1.bf16.msra.mxu0 0
    %2045 = vmatprep.subr.bf16.mxu0 0
    %2046 = vmatpush1.bf16.msra.mxu0 0
    %2047 = vmatprep.subr.bf16.mxu0 0
    %2048 = vmatpush1.bf16.msra.mxu0 0
    %2049 = vmatprep.subr.bf16.mxu0 0
    %2050 = vmatpush1.bf16.msra.mxu0 0
    %2051 = vmatprep.subr.bf16.mxu0 0
    %2052 = vmatpush1.bf16.msra.mxu0 0
    %2053 = vmatprep.subr.bf16.mxu0 0
    %2054 = vmatpush1.bf16.msra.mxu0 0
    %2055 = vmatprep.subr.bf16.mxu0 0
    %2056 = vmatpush1.bf16.msra.mxu0 %v2039
    %2057 = vmatprep.subr.bf16.mxu0 0
    %2058 = vmatpush2.bf16.msra.mxu0 0
    %2059 = vmatprep.subr.bf16.mxu0 0
    %2060 = vmatpush2.bf16.msra.mxu0 0
    %2061 = vmatprep.subr.bf16.mxu0 0
    %2062 = vmatpush2.bf16.msra.mxu0 0
    %2063 = vmatprep.subr.bf16.mxu0 0
    %2064 = vmatpush2.bf16.msra.mxu0 0
    %2065 = vmatprep.subr.bf16.mxu0 0
    %2066 = vmatpush2.bf16.msra.mxu0 0
    %2067 = vmatprep.subr.bf16.mxu0 0
    %2068 = vmatpush2.bf16.msra.mxu0 0
    %2069 = vmatprep.subr.bf16.mxu0 0
    %2070 = vmatpush2.bf16.msra.mxu0 0
    %2071 = vmatprep.subr.bf16.mxu0 0
    %2072 = vmatpush2.bf16.msra.mxu0 0
    %2073 = vmatprep.mubr.bf16.mxu0 0
    %2074 = vmatmul.mubr.bf16.gmra.mxu0 %v2036
    %v2075 = vpop.f32.mrf.mxu0
    %v2076 = vadd.f32 0.0, %v2075
    %v2077 = vpop.f32.mrf.mxu0
    %v2078 = vpop.f32.mrf.mxu0
    %v2079 = vadd.f32 0.0, %v2078
    %v2080 = vpop.f32.mrf.mxu0
    %2081 = vdwg.mxu0
    %v2082 = vadd.f32 %v1600, %v2076
    %v2083 = vadd.f32 %v1601, %v2079
    %v2084 = vadd.f32 %v101, %v2082
    %v2085 = vadd.f32 %v116, %v2083
    %v2086 = vld [vmem:[%s9] sm:$0x1]
    %v2088 = vlaneseq
    %v2089 = vshrl.u32 %v2088, 7
    %v2090 = vsub.s32 0, %v2089
    %v2091 = vrot.slane %v2086, %v2090
    %v2093 = vadd.f32 %v2084, %v2091
    %v2094 = vadd.f32 %v2085, %v2091
    %v2095 = vld [vmem:[%s10] sm:$0x1]
    %v2096 = vld [vmem:[%s11] sm:$0x1]
    %v2097 = vsel %vm181, %v2093, 0.0
    %2098 = vadd.xlane.f32.xlu0 %v2097
    %v2099 = vpop.xlane.xlu0 %2098
    %v2100 = vsel %vm181, %v2094, 0.0
    %2101 = vadd.xlane.f32.xlu0 %v2100
    %v2102 = vpop.xlane.xlu0 %2101
    %v2103 = vrcp.pop 32.0
    %v2104 = vmul.f32 %v2099, %v2103
    %v2105 = vmul.f32 %v2102, %v2103
    %v2106 = vsub.f32 %v2093, %v2104
    %v2107 = vsub.f32 %v2094, %v2105
    %v2108 = vmul.f32 %v2106, %v2106
    %v2109 = vmul.f32 %v2107, %v2107
    %v2110 = vsel %vm181, %v2108, 0.0
    %2111 = vadd.xlane.f32.xlu0 %v2110
    %v2112 = vpop.xlane.xlu0 %2111
    %v2113 = vsel %vm181, %v2109, 0.0
    %2114 = vadd.xlane.f32.xlu0 %v2113
    %v2115 = vpop.xlane.xlu0 %2114
    %v2116 = vmul.f32 %v2112, %v2103
    %v2117 = vmul.f32 %v2115, %v2103
    %v2118 = vadd.f32 %v2116, 1e-05
    %v2119 = vadd.f32 %v2117, 1e-05
    %v2120 = vrsqrt.pop %v2118
    %v2121 = vrsqrt.pop %v2119
    %v2122 = vmul.f32 %v2106, %v2120
    %v2123 = vmul.f32 %v2107, %v2121
    %v2125 = vlaneseq
    %v2126 = vshrl.u32 %v2125, 7
    %v2127 = vsub.s32 0, %v2126
    %v2128 = vrot.slane %v2095, %v2127
    %v2130 = vmul.f32 %v2122, %v2128
    %v2131 = vmul.f32 %v2123, %v2128
    %v2133 = vlaneseq
    %v2134 = vshrl.u32 %v2133, 7
    %v2135 = vsub.s32 0, %v2134
    %v2136 = vrot.slane %v2096, %v2135
    %v2138 = vadd.f32 %v2130, %v2136
    %v2139 = vadd.f32 %v2131, %v2136
    %v2140 = vld [vmem:[%s12] sm:$0x1]
    %v2141 = vld [vmem:[%s13] sm:$0x1]
    %v2142 = vsel %vm181, %v2138, 0.0
    %2143 = vadd.xlane.f32.xlu0 %v2142
    %v2144 = vpop.xlane.xlu0 %2143
    %v2145 = vsel %vm181, %v2139, 0.0
    %2146 = vadd.xlane.f32.xlu0 %v2145
    %v2147 = vpop.xlane.xlu0 %2146
    %v2148 = vmul.f32 %v2144, %v2103
    %v2149 = vmul.f32 %v2147, %v2103
    %v2150 = vsub.f32 %v2138, %v2148
    %v2151 = vsub.f32 %v2139, %v2149
    %v2152 = vmul.f32 %v2150, %v2150
    %v2153 = vmul.f32 %v2151, %v2151
    %v2154 = vsel %vm181, %v2152, 0.0
    %2155 = vadd.xlane.f32.xlu0 %v2154
    %v2156 = vpop.xlane.xlu0 %2155
    %v2157 = vsel %vm181, %v2153, 0.0
    %2158 = vadd.xlane.f32.xlu0 %v2157
    %v2159 = vpop.xlane.xlu0 %2158
    %v2160 = vmul.f32 %v2156, %v2103
    %v2161 = vmul.f32 %v2159, %v2103
    %v2162 = vadd.f32 %v2160, 2.5e-06
    %v2163 = vadd.f32 %v2161, 2.5e-06
    %v2164 = vrsqrt.pop %v2162
    %v2165 = vrsqrt.pop %v2163
    %v2166 = vmul.f32 %v2150, %v2164
    %v2167 = vmul.f32 %v2151, %v2165
    %v2169 = vlaneseq
    %v2170 = vshrl.u32 %v2169, 7
    %v2171 = vsub.s32 0, %v2170
    %v2172 = vrot.slane %v2140, %v2171
    %v2174 = vmul.f32 %v2166, %v2172
    %v2175 = vmul.f32 %v2167, %v2172
    %v2177 = vlaneseq
    %v2178 = vshrl.u32 %v2177, 7
    %v2179 = vsub.s32 0, %v2178
    %v2180 = vrot.slane %v2141, %v2179
    %v2182 = vadd.f32 %v2174, %v2180
    %v2183 = vadd.f32 %v2175, %v2180
    %v2185 = vcombine.high %v2182, %v2182
    %v2187 = vunpack.c.l.s4 1966171168
    %v2188 = vunpack.c.0.s8 %v2187
    %v2189 = vlaneseq
    %v2190 = vshrl.u32 %v2189, 7
    %v2191 = vsub.s32 %v2188, %v2190
    %v2192 = vrot.slane %v2182, %v2191
    %v2194 = vunpack.c.l.s4 1966171168
    %v2195 = vunpack.c.0.s8 %v2194
    %v2196 = vlaneseq
    %v2197 = vshrl.u32 %v2196, 7
    %v2198 = vsub.s32 %v2195, %v2197
    %v2199 = vrot.slane %v2185, %v2198
    %v2200 = vcombine.high %v2192, %v2192
    %v2201 = vcombine.high %v2199, %v2199
    %v2203 = vunpack.c.l.s4 1966171168
    %v2204 = vunpack.c.0.s8 %v2203
    %v2205 = vlaneseq
    %v2206 = vshrl.u32 %v2205, 7
    %v2207 = vsub.s32 %v2204, %v2206
    %v2208 = vrot.slane %v2192, %v2207
    %v2210 = vunpack.c.l.s4 1966171168
    %v2211 = vunpack.c.0.s8 %v2210
    %v2212 = vlaneseq
    %v2213 = vshrl.u32 %v2212, 7
    %v2214 = vsub.s32 %v2211, %v2213
    %v2215 = vrot.slane %v2199, %v2214
    %v2217 = vunpack.c.l.s4 1966171168
    %v2218 = vunpack.c.0.s8 %v2217
    %v2219 = vlaneseq
    %v2220 = vshrl.u32 %v2219, 7
    %v2221 = vsub.s32 %v2218, %v2220
    %v2222 = vrot.slane %v2200, %v2221
    %v2224 = vunpack.c.l.s4 1966171168
    %v2225 = vunpack.c.0.s8 %v2224
    %v2226 = vlaneseq
    %v2227 = vshrl.u32 %v2226, 7
    %v2228 = vsub.s32 %v2225, %v2227
    %v2229 = vrot.slane %v2201, %v2228
    %v2230 = vcombine.high %v2208, %v2208
    %v2231 = vcombine.high %v2215, %v2215
    %v2232 = vcombine.high %v2222, %v2222
    %v2233 = vcombine.high %v2229, %v2229
    %vm2242 = vcmask 253952
    %2243 = vst.msk [vmem:[#allocation2] sm:$0x1] %vm2242, %v2208
    %2244 = vst.msk [vmem:[#allocation2 + $0x2] sm:$0x1] %vm2242, %v2222
    %2245 = vst.msk [vmem:[#allocation2 + $0x4] sm:$0x1] %vm2242, %v2230
    %2246 = vst.msk [vmem:[#allocation2 + $0x6] sm:$0x1] %vm2242, %v2232
    %2247 = vst.msk [vmem:[#allocation2 + $0x8] sm:$0x1] %vm2242, %v2215
    %2248 = vst.msk [vmem:[#allocation2 + $0xa] sm:$0x1] %vm2242, %v2229
    %2249 = vst.msk [vmem:[#allocation2 + $0xc] sm:$0x1] %vm2242, %v2231
    %2250 = vst.msk [vmem:[#allocation2 + $0xe] sm:$0x1] %vm2242, %v2233
    %v2252 = vcombine.high %v2183, %v2183
    %v2254 = vunpack.c.l.s4 1966171168
    %v2255 = vunpack.c.0.s8 %v2254
    %v2256 = vlaneseq
    %v2257 = vshrl.u32 %v2256, 7
    %v2258 = vsub.s32 %v2255, %v2257
    %v2259 = vrot.slane %v2183, %v2258
    %v2261 = vunpack.c.l.s4 1966171168
    %v2262 = vunpack.c.0.s8 %v2261
    %v2263 = vlaneseq
    %v2264 = vshrl.u32 %v2263, 7
    %v2265 = vsub.s32 %v2262, %v2264
    %v2266 = vrot.slane %v2252, %v2265
    %v2267 = vcombine.high %v2259, %v2259
    %v2268 = vcombine.high %v2266, %v2266
    %v2270 = vunpack.c.l.s4 1966171168
    %v2271 = vunpack.c.0.s8 %v2270
    %v2272 = vlaneseq
    %v2273 = vshrl.u32 %v2272, 7
    %v2274 = vsub.s32 %v2271, %v2273
    %v2275 = vrot.slane %v2259, %v2274
    %v2277 = vunpack.c.l.s4 1966171168
    %v2278 = vunpack.c.0.s8 %v2277
    %v2279 = vlaneseq
    %v2280 = vshrl.u32 %v2279, 7
    %v2281 = vsub.s32 %v2278, %v2280
    %v2282 = vrot.slane %v2266, %v2281
    %v2284 = vunpack.c.l.s4 1966171168
    %v2285 = vunpack.c.0.s8 %v2284
    %v2286 = vlaneseq
    %v2287 = vshrl.u32 %v2286, 7
    %v2288 = vsub.s32 %v2285, %v2287
    %v2289 = vrot.slane %v2267, %v2288
    %v2291 = vunpack.c.l.s4 1966171168
    %v2292 = vunpack.c.0.s8 %v2291
    %v2293 = vlaneseq
    %v2294 = vshrl.u32 %v2293, 7
    %v2295 = vsub.s32 %v2292, %v2294
    %v2296 = vrot.slane %v2268, %v2295
    %v2297 = vcombine.high %v2275, %v2275
    %v2298 = vcombine.high %v2282, %v2282
    %v2299 = vcombine.high %v2289, %v2289
    %v2300 = vcombine.high %v2296, %v2296
    %2309 = vst.msk [vmem:[#allocation2 + $0x1] sm:$0x1] %vm2242, %v2275
    %2310 = vst.msk [vmem:[#allocation2 + $0x3] sm:$0x1] %vm2242, %v2289
    %2311 = vst.msk [vmem:[#allocation2 + $0x5] sm:$0x1] %vm2242, %v2297
    %2312 = vst.msk [vmem:[#allocation2 + $0x7] sm:$0x1] %vm2242, %v2299
    %2313 = vst.msk [vmem:[#allocation2 + $0x9] sm:$0x1] %vm2242, %v2282
    %2314 = vst.msk [vmem:[#allocation2 + $0xb] sm:$0x1] %vm2242, %v2296
    %2315 = vst.msk [vmem:[#allocation2 + $0xd] sm:$0x1] %vm2242, %v2298
    %2316 = vst.msk [vmem:[#allocation2 + $0xf] sm:$0x1] %vm2242, %v2300
    // Predicated region
    $region58: #{tpu_custom_call.1} parent=1 // pred_check
      _
    $region59: #{tpu_custom_call.1} parent=1 // pred_check_branch
      %2318 = sbr.rel (0) target = $region61
    $region60: #{tpu_custom_call.1} parent=1 // pred_region
      %s2320 = ssub.s32 256, 256
      %2321 = vsyncadd [#allocation3], %s2320
      %s2322 = sshll.u32 [#allocation2], 4
      %s2323 = int_to_ptr.vmem [resolvable:$true] %s2322
      %2328 = dma.vmem_to_hbm [thread:$0]  %s2323, 256, %s14, [#allocation3], 32, 32, 2
    $region61: #{tpu_custom_call.1} parent=1 // pred_fallthru
      _
    // Predicated region
    $region62: #{tpu_custom_call.1} parent=1 // pred_check
      _
    $region63: #{tpu_custom_call.1} parent=1 // pred_check_branch
      %2330 = sbr.rel (0) target = $region65
    $region64: #{tpu_custom_call.1} parent=1 // pred_region
      %2331 = dma.done [#allocation3], 256
    $region65: #{tpu_custom_call.1} parent=1 // pred_fallthru
      _
    %2332 = vsyncpa [#allocation3], 1

</llo_original>
